<compile_context>
chip_gen: v7x
topology: tpu7x:2x2x1
jax: 0.10.0
libtpu: 0.0.40
codegen_flags: <defaults>
</compile_context>

<pallas_src>
import functools

import jax
import jax.numpy as jnp
from jax import lax
from jax.experimental import pallas as pl
from jax.experimental.pallas import tpu as pltpu


def _cat_attention_kernel(x_ref, wqkv_ref, wo_ref, b_ref, y_ref, attn_ref, *,
                          heads, dim_head, scale):
    inner = heads * dim_head
    x = x_ref[...]                                                        # (N, E) f32

    # Fused, lane-dense QKV projection: one MXU op instead of 3*heads tiny ones.
    qkv = jnp.dot(x, wqkv_ref[...], preferred_element_type=jnp.float32)   # (N, 3*inner)
    q = qkv[:, :inner] * scale                                            # scale once
    k = qkv[:, inner:2 * inner]
    v = qkv[:, 2 * inner:]

    attn_parts = []
    o_parts = []
    for h in range(heads):                      # static unroll over heads
        sl = slice(h * dim_head, (h + 1) * dim_head)
        qh, kh, vh = q[:, sl], k[:, sl], v[:, sl]
        # sim = q_h @ k_h^T (contract over d, no explicit transpose)
        sim = lax.dot_general(qh, kh, (((1,), (1,)), ((), ())),
                              preferred_element_type=jnp.float32)         # (N, N)
        # Numerically-stable softmax in f32; exact normalization so rows sum to 1.
        sim = sim - jnp.max(sim, axis=-1, keepdims=True)
        p = jnp.exp(sim)
        a = p / jnp.sum(p, axis=-1, keepdims=True)
        attn_parts.append(a)
        # TODO(synk): attention dropout omitted (module default p=0.0 / inference).
        o_parts.append(jnp.dot(a, vh, preferred_element_type=jnp.float32))  # (N, d)

    # Lane-dense stores: attn as (N, heads*N), o as (N, inner=128).
    attn_ref[...] = jnp.concatenate(attn_parts, axis=-1)                  # (N, H*N)
    o = jnp.concatenate(o_parts, axis=-1)                                  # (N, inner)
    y_ref[...] = (jnp.dot(o, wo_ref[...], preferred_element_type=jnp.float32)
                  + b_ref[...]).astype(y_ref.dtype)


@functools.partial(jax.jit, static_argnames=("heads", "dim_head"))
def cat_attention(x, w_qkv, w_out, b_out, *, heads, dim_head):
    """x: (B, N, E); w_qkv: (E, 3*heads*dim_head); w_out: (heads*dim_head, E);
    b_out: (E,).  Returns (y, attn): y (B, N, E) f32, attn (B, heads, N, N) f32."""
    B, N, E = x.shape
    inner = heads * dim_head
    scale = dim_head ** -0.5
    bias = b_out.reshape(1, E).astype(jnp.float32)

    flops = (2 * B * N * E * 3 * inner            # fused qkv projection
             + 4 * B * heads * N * N * dim_head   # q k^T and attn @ v
             + 2 * B * N * inner * E)             # output projection
    bytes_accessed = 4 * (B * N * E + E * 3 * inner + inner * E + E
                          + B * N * E + B * heads * N * N)

    kernel = functools.partial(_cat_attention_kernel,
                               heads=heads, dim_head=dim_head, scale=scale)

    y, attn_flat = pl.pallas_call(
        kernel,
        out_shape=(jax.ShapeDtypeStruct((B, N, E), jnp.float32),
                   jax.ShapeDtypeStruct((B, N, heads * N), jnp.float32)),
        grid_spec=pltpu.PrefetchScalarGridSpec(
            num_scalar_prefetch=0,
            grid=(B,),
            in_specs=[
                pl.BlockSpec((None, N, E), lambda b: (b, 0, 0)),           # x (per-batch tile)
                pl.BlockSpec((E, 3 * inner), lambda b: (0, 0)),            # W_qkv (resident)
                pl.BlockSpec((inner, E), lambda b: (0, 0)),                # W_out (resident)
                pl.BlockSpec((1, E), lambda b: (0, 0)),                    # bias  (resident)
            ],
            out_specs=[
                pl.BlockSpec((None, N, E), lambda b: (b, 0, 0)),           # y
                pl.BlockSpec((None, N, heads * N), lambda b: (b, 0, 0)),   # attn (lane-dense)
            ],
        ),
        compiler_params=pltpu.CompilerParams(
            dimension_semantics=("parallel",),
        ),
        cost_estimate=pl.CostEstimate(
            flops=flops,
            transcendentals=B * heads * N * N,
            bytes_accessed=bytes_accessed),
    )(x.astype(jnp.float32), w_qkv.astype(jnp.float32),
      w_out.astype(jnp.float32), bias)

    # (B, N, H*N) -> (B, H, N, N): metadata-only reshuffle in the wrapper.
    attn = attn_flat.reshape(B, N, heads, N).transpose(0, 2, 1, 3)
    return y, attn


if __name__ == "__main__":
    # Small shapes consistent with the module defaults: heads=8, dim_head=16.
    B, N, E = 2, 8, 32
    heads, dim_head = 8, 16
    inner = heads * dim_head

    key = jax.random.PRNGKey(0)
    kx, kqkv, ko, kb = jax.random.split(key, 4)
    x = jax.random.normal(kx, (B, N, E), dtype=jnp.float32)
    w_qkv = jax.random.normal(kqkv, (E, 3 * inner), dtype=jnp.float32) / jnp.sqrt(E)
    w_out = jax.random.normal(ko, (inner, E), dtype=jnp.float32) / jnp.sqrt(inner)
    b_out = jax.random.normal(kb, (E,), dtype=jnp.float32) * 0.01

    y, attn = cat_attention(x, w_qkv, w_out, b_out, heads=heads, dim_head=dim_head)
    y, attn = jax.block_until_ready((y, attn))

    # Pure-JAX f32 reference of the PyTorch forward.
    scale = dim_head ** -0.5
    qkv = x @ w_qkv
    q_r, k_r, v_r = jnp.split(qkv, 3, axis=-1)
    split_heads = lambda t: t.reshape(B, N, heads, dim_head).transpose(0, 2, 1, 3)
    q_r, k_r, v_r = map(split_heads, (q_r, k_r, v_r))
    sim_r = jnp.einsum('bhid,bhjd->bhij', q_r, k_r) * scale
    attn_expected = jax.nn.softmax(sim_r, axis=-1)
    out_r = jnp.einsum('bhij,bhjd->bhid', attn_expected, v_r)
    out_r = out_r.transpose(0, 2, 1, 3).reshape(B, N, inner)
    y_expected = out_r @ w_out + b_out

    assert y.shape == (B, N, E) and attn.shape == (B, heads, N, N)
    assert jnp.allclose(attn, attn_expected, atol=3e-2, rtol=3e-2), \
        float(jnp.max(jnp.abs(attn - attn_expected)))
    assert jnp.allclose(y, y_expected, atol=3e-2, rtol=3e-2), \
        float(jnp.max(jnp.abs(y - y_expected)))
    # Attention rows must sum to 1 (exact softmax normalization in-kernel).
    assert jnp.allclose(attn.sum(-1), 1.0, atol=1e-5)

    print("KERNEL_OK")
</pallas_src>

<mosaic_0001>
module attributes {stable_mosaic.version = 11 : i64} {
  func.func @_cat_attention_kernel(%arg0: i32, %arg1: memref<1x8x32xf32, #tpu.memory_space<vmem>>, %arg2: memref<32x384xf32, #tpu.memory_space<vmem>>, %arg3: memref<128x32xf32, #tpu.memory_space<vmem>>, %arg4: memref<1x32xf32, #tpu.memory_space<vmem>>, %arg5: memref<1x8x32xf32, #tpu.memory_space<vmem>>, %arg6: memref<1x8x64xf32, #tpu.memory_space<vmem>>) attributes {dimension_semantics = [#tpu.dimension_semantics<parallel>], iteration_bounds = array<i64: 2>, scalar_prefetch = 0 : i64, scratch_operands = 0 : i64, tpu.core_type = #tpu.core_type<tc>, window_params = [{transform_indices = @transform_0, window_bounds = array<i64: 1, 8, 32>}, {pipeline_mode = #tpu.pipeline_mode<synchronous>, transform_indices = @transform_1, window_bounds = array<i64: 32, 384>}, {pipeline_mode = #tpu.pipeline_mode<synchronous>, transform_indices = @transform_2, window_bounds = array<i64: 128, 32>}, {pipeline_mode = #tpu.pipeline_mode<synchronous>, transform_indices = @transform_3, window_bounds = array<i64: 1, 32>}, {transform_indices = @transform_4, window_bounds = array<i64: 1, 8, 32>}, {transform_indices = @transform_5, window_bounds = array<i64: 1, 8, 64>}]} {
    %c0 = arith.constant 0 : index
    %c0_0 = arith.constant 0 : index
    %c0_1 = arith.constant 0 : index
    %0 = vector.load %arg1[%c0, %c0_0, %c0_1] : memref<1x8x32xf32, #tpu.memory_space<vmem>>, vector<1x8x32xf32>
    %1 = vector.shape_cast %0 : vector<1x8x32xf32> to vector<8x32xf32>
    %c0_2 = arith.constant 0 : index
    %c0_3 = arith.constant 0 : index
    %2 = vector.load %arg2[%c0_2, %c0_3] : memref<32x384xf32, #tpu.memory_space<vmem>>, vector<32x384xf32>
    %cst = arith.constant dense<0.000000e+00> : vector<8x384xf32>
    %3 = tpu.matmul %1, %2, %cst {dimension_numbers = #tpu.dot_dimension_numbers<[1], [0], [0], [1], [0, 0, 1, 1], [], []>} : vector<8x32xf32>, vector<32x384xf32>, vector<8x384xf32> -> vector<8x384xf32>
    %4 = vector.extract_strided_slice %3 {offsets = [0, 0], sizes = [8, 128], strides = [1, 1]} : vector<8x384xf32> to vector<8x128xf32>
    %cst_4 = arith.constant 2.500000e-01 : f32
    %5 = vector.broadcast %cst_4 : f32 to vector<8x128xf32>
    %6 = arith.mulf %4, %5 : vector<8x128xf32>
    %7 = vector.extract_strided_slice %3 {offsets = [0, 128], sizes = [8, 128], strides = [1, 1]} : vector<8x384xf32> to vector<8x128xf32>
    %8 = vector.extract_strided_slice %3 {offsets = [0, 256], sizes = [8, 128], strides = [1, 1]} : vector<8x384xf32> to vector<8x128xf32>
    %9 = vector.extract_strided_slice %6 {offsets = [0, 0], sizes = [8, 16], strides = [1, 1]} : vector<8x128xf32> to vector<8x16xf32>
    %10 = vector.extract_strided_slice %7 {offsets = [0, 0], sizes = [8, 16], strides = [1, 1]} : vector<8x128xf32> to vector<8x16xf32>
    %11 = vector.extract_strided_slice %8 {offsets = [0, 0], sizes = [8, 16], strides = [1, 1]} : vector<8x128xf32> to vector<8x16xf32>
    %cst_5 = arith.constant dense<0.000000e+00> : vector<8x8xf32>
    %12 = tpu.matmul %9, %10, %cst_5 {dimension_numbers = #tpu.dot_dimension_numbers<[1], [1], [0], [0], [0, 0, 1, 0], [], []>} : vector<8x16xf32>, vector<8x16xf32>, vector<8x8xf32> -> vector<8x8xf32>
    %cst_6 = arith.constant dense<0xFF800000> : vector<8xf32>
    %13 = vector.multi_reduction <maximumf>, %12, %cst_6 [1] : vector<8x8xf32> to vector<8xf32>
    %14 = vector.shape_cast %13 : vector<8xf32> to vector<8x1xf32>
    %15 = vector.broadcast %14 : vector<8x1xf32> to vector<8x8xf32>
    %16 = arith.subf %12, %15 : vector<8x8xf32>
    %17 = math.exp %16 : vector<8x8xf32>
    %cst_7 = arith.constant dense<0.000000e+00> : vector<8xf32>
    %18 = vector.multi_reduction <add>, %17, %cst_7 [1] : vector<8x8xf32> to vector<8xf32>
    %19 = vector.shape_cast %18 : vector<8xf32> to vector<8x1xf32>
    %20 = vector.broadcast %19 : vector<8x1xf32> to vector<8x8xf32>
    %21 = arith.divf %17, %20 : vector<8x8xf32>
    %cst_8 = arith.constant dense<0.000000e+00> : vector<8x16xf32>
    %22 = tpu.matmul %21, %11, %cst_8 {dimension_numbers = #tpu.dot_dimension_numbers<[1], [0], [0], [1], [0, 0, 1, 1], [], []>} : vector<8x8xf32>, vector<8x16xf32>, vector<8x16xf32> -> vector<8x16xf32>
    %23 = vector.extract_strided_slice %6 {offsets = [0, 16], sizes = [8, 16], strides = [1, 1]} : vector<8x128xf32> to vector<8x16xf32>
    %24 = vector.extract_strided_slice %7 {offsets = [0, 16], sizes = [8, 16], strides = [1, 1]} : vector<8x128xf32> to vector<8x16xf32>
    %25 = vector.extract_strided_slice %8 {offsets = [0, 16], sizes = [8, 16], strides = [1, 1]} : vector<8x128xf32> to vector<8x16xf32>
    %cst_9 = arith.constant dense<0.000000e+00> : vector<8x8xf32>
    %26 = tpu.matmul %23, %24, %cst_9 {dimension_numbers = #tpu.dot_dimension_numbers<[1], [1], [0], [0], [0, 0, 1, 0], [], []>} : vector<8x16xf32>, vector<8x16xf32>, vector<8x8xf32> -> vector<8x8xf32>
    %cst_10 = arith.constant dense<0xFF800000> : vector<8xf32>
    %27 = vector.multi_reduction <maximumf>, %26, %cst_10 [1] : vector<8x8xf32> to vector<8xf32>
    %28 = vector.shape_cast %27 : vector<8xf32> to vector<8x1xf32>
    %29 = vector.broadcast %28 : vector<8x1xf32> to vector<8x8xf32>
    %30 = arith.subf %26, %29 : vector<8x8xf32>
    %31 = math.exp %30 : vector<8x8xf32>
    %cst_11 = arith.constant dense<0.000000e+00> : vector<8xf32>
    %32 = vector.multi_reduction <add>, %31, %cst_11 [1] : vector<8x8xf32> to vector<8xf32>
    %33 = vector.shape_cast %32 : vector<8xf32> to vector<8x1xf32>
    %34 = vector.broadcast %33 : vector<8x1xf32> to vector<8x8xf32>
    %35 = arith.divf %31, %34 : vector<8x8xf32>
    %cst_12 = arith.constant dense<0.000000e+00> : vector<8x16xf32>
    %36 = tpu.matmul %35, %25, %cst_12 {dimension_numbers = #tpu.dot_dimension_numbers<[1], [0], [0], [1], [0, 0, 1, 1], [], []>} : vector<8x8xf32>, vector<8x16xf32>, vector<8x16xf32> -> vector<8x16xf32>
    %37 = vector.extract_strided_slice %6 {offsets = [0, 32], sizes = [8, 16], strides = [1, 1]} : vector<8x128xf32> to vector<8x16xf32>
    %38 = vector.extract_strided_slice %7 {offsets = [0, 32], sizes = [8, 16], strides = [1, 1]} : vector<8x128xf32> to vector<8x16xf32>
    %39 = vector.extract_strided_slice %8 {offsets = [0, 32], sizes = [8, 16], strides = [1, 1]} : vector<8x128xf32> to vector<8x16xf32>
    %cst_13 = arith.constant dense<0.000000e+00> : vector<8x8xf32>
    %40 = tpu.matmul %37, %38, %cst_13 {dimension_numbers = #tpu.dot_dimension_numbers<[1], [1], [0], [0], [0, 0, 1, 0], [], []>} : vector<8x16xf32>, vector<8x16xf32>, vector<8x8xf32> -> vector<8x8xf32>
    %cst_14 = arith.constant dense<0xFF800000> : vector<8xf32>
    %41 = vector.multi_reduction <maximumf>, %40, %cst_14 [1] : vector<8x8xf32> to vector<8xf32>
    %42 = vector.shape_cast %41 : vector<8xf32> to vector<8x1xf32>
    %43 = vector.broadcast %42 : vector<8x1xf32> to vector<8x8xf32>
    %44 = arith.subf %40, %43 : vector<8x8xf32>
    %45 = math.exp %44 : vector<8x8xf32>
    %cst_15 = arith.constant dense<0.000000e+00> : vector<8xf32>
    %46 = vector.multi_reduction <add>, %45, %cst_15 [1] : vector<8x8xf32> to vector<8xf32>
    %47 = vector.shape_cast %46 : vector<8xf32> to vector<8x1xf32>
    %48 = vector.broadcast %47 : vector<8x1xf32> to vector<8x8xf32>
    %49 = arith.divf %45, %48 : vector<8x8xf32>
    %cst_16 = arith.constant dense<0.000000e+00> : vector<8x16xf32>
    %50 = tpu.matmul %49, %39, %cst_16 {dimension_numbers = #tpu.dot_dimension_numbers<[1], [0], [0], [1], [0, 0, 1, 1], [], []>} : vector<8x8xf32>, vector<8x16xf32>, vector<8x16xf32> -> vector<8x16xf32>
    %51 = vector.extract_strided_slice %6 {offsets = [0, 48], sizes = [8, 16], strides = [1, 1]} : vector<8x128xf32> to vector<8x16xf32>
    %52 = vector.extract_strided_slice %7 {offsets = [0, 48], sizes = [8, 16], strides = [1, 1]} : vector<8x128xf32> to vector<8x16xf32>
    %53 = vector.extract_strided_slice %8 {offsets = [0, 48], sizes = [8, 16], strides = [1, 1]} : vector<8x128xf32> to vector<8x16xf32>
    %cst_17 = arith.constant dense<0.000000e+00> : vector<8x8xf32>
    %54 = tpu.matmul %51, %52, %cst_17 {dimension_numbers = #tpu.dot_dimension_numbers<[1], [1], [0], [0], [0, 0, 1, 0], [], []>} : vector<8x16xf32>, vector<8x16xf32>, vector<8x8xf32> -> vector<8x8xf32>
    %cst_18 = arith.constant dense<0xFF800000> : vector<8xf32>
    %55 = vector.multi_reduction <maximumf>, %54, %cst_18 [1] : vector<8x8xf32> to vector<8xf32>
    %56 = vector.shape_cast %55 : vector<8xf32> to vector<8x1xf32>
    %57 = vector.broadcast %56 : vector<8x1xf32> to vector<8x8xf32>
    %58 = arith.subf %54, %57 : vector<8x8xf32>
    %59 = math.exp %58 : vector<8x8xf32>
    %cst_19 = arith.constant dense<0.000000e+00> : vector<8xf32>
    %60 = vector.multi_reduction <add>, %59, %cst_19 [1] : vector<8x8xf32> to vector<8xf32>
    %61 = vector.shape_cast %60 : vector<8xf32> to vector<8x1xf32>
    %62 = vector.broadcast %61 : vector<8x1xf32> to vector<8x8xf32>
    %63 = arith.divf %59, %62 : vector<8x8xf32>
    %cst_20 = arith.constant dense<0.000000e+00> : vector<8x16xf32>
    %64 = tpu.matmul %63, %53, %cst_20 {dimension_numbers = #tpu.dot_dimension_numbers<[1], [0], [0], [1], [0, 0, 1, 1], [], []>} : vector<8x8xf32>, vector<8x16xf32>, vector<8x16xf32> -> vector<8x16xf32>
    %65 = vector.extract_strided_slice %6 {offsets = [0, 64], sizes = [8, 16], strides = [1, 1]} : vector<8x128xf32> to vector<8x16xf32>
    %66 = vector.extract_strided_slice %7 {offsets = [0, 64], sizes = [8, 16], strides = [1, 1]} : vector<8x128xf32> to vector<8x16xf32>
    %67 = vector.extract_strided_slice %8 {offsets = [0, 64], sizes = [8, 16], strides = [1, 1]} : vector<8x128xf32> to vector<8x16xf32>
    %cst_21 = arith.constant dense<0.000000e+00> : vector<8x8xf32>
    %68 = tpu.matmul %65, %66, %cst_21 {dimension_numbers = #tpu.dot_dimension_numbers<[1], [1], [0], [0], [0, 0, 1, 0], [], []>} : vector<8x16xf32>, vector<8x16xf32>, vector<8x8xf32> -> vector<8x8xf32>
    %cst_22 = arith.constant dense<0xFF800000> : vector<8xf32>
    %69 = vector.multi_reduction <maximumf>, %68, %cst_22 [1] : vector<8x8xf32> to vector<8xf32>
    %70 = vector.shape_cast %69 : vector<8xf32> to vector<8x1xf32>
    %71 = vector.broadcast %70 : vector<8x1xf32> to vector<8x8xf32>
    %72 = arith.subf %68, %71 : vector<8x8xf32>
    %73 = math.exp %72 : vector<8x8xf32>
    %cst_23 = arith.constant dense<0.000000e+00> : vector<8xf32>
    %74 = vector.multi_reduction <add>, %73, %cst_23 [1] : vector<8x8xf32> to vector<8xf32>
    %75 = vector.shape_cast %74 : vector<8xf32> to vector<8x1xf32>
    %76 = vector.broadcast %75 : vector<8x1xf32> to vector<8x8xf32>
    %77 = arith.divf %73, %76 : vector<8x8xf32>
    %cst_24 = arith.constant dense<0.000000e+00> : vector<8x16xf32>
    %78 = tpu.matmul %77, %67, %cst_24 {dimension_numbers = #tpu.dot_dimension_numbers<[1], [0], [0], [1], [0, 0, 1, 1], [], []>} : vector<8x8xf32>, vector<8x16xf32>, vector<8x16xf32> -> vector<8x16xf32>
    %79 = vector.extract_strided_slice %6 {offsets = [0, 80], sizes = [8, 16], strides = [1, 1]} : vector<8x128xf32> to vector<8x16xf32>
    %80 = vector.extract_strided_slice %7 {offsets = [0, 80], sizes = [8, 16], strides = [1, 1]} : vector<8x128xf32> to vector<8x16xf32>
    %81 = vector.extract_strided_slice %8 {offsets = [0, 80], sizes = [8, 16], strides = [1, 1]} : vector<8x128xf32> to vector<8x16xf32>
    %cst_25 = arith.constant dense<0.000000e+00> : vector<8x8xf32>
    %82 = tpu.matmul %79, %80, %cst_25 {dimension_numbers = #tpu.dot_dimension_numbers<[1], [1], [0], [0], [0, 0, 1, 0], [], []>} : vector<8x16xf32>, vector<8x16xf32>, vector<8x8xf32> -> vector<8x8xf32>
    %cst_26 = arith.constant dense<0xFF800000> : vector<8xf32>
    %83 = vector.multi_reduction <maximumf>, %82, %cst_26 [1] : vector<8x8xf32> to vector<8xf32>
    %84 = vector.shape_cast %83 : vector<8xf32> to vector<8x1xf32>
    %85 = vector.broadcast %84 : vector<8x1xf32> to vector<8x8xf32>
    %86 = arith.subf %82, %85 : vector<8x8xf32>
    %87 = math.exp %86 : vector<8x8xf32>
    %cst_27 = arith.constant dense<0.000000e+00> : vector<8xf32>
    %88 = vector.multi_reduction <add>, %87, %cst_27 [1] : vector<8x8xf32> to vector<8xf32>
    %89 = vector.shape_cast %88 : vector<8xf32> to vector<8x1xf32>
    %90 = vector.broadcast %89 : vector<8x1xf32> to vector<8x8xf32>
    %91 = arith.divf %87, %90 : vector<8x8xf32>
    %cst_28 = arith.constant dense<0.000000e+00> : vector<8x16xf32>
    %92 = tpu.matmul %91, %81, %cst_28 {dimension_numbers = #tpu.dot_dimension_numbers<[1], [0], [0], [1], [0, 0, 1, 1], [], []>} : vector<8x8xf32>, vector<8x16xf32>, vector<8x16xf32> -> vector<8x16xf32>
    %93 = vector.extract_strided_slice %6 {offsets = [0, 96], sizes = [8, 16], strides = [1, 1]} : vector<8x128xf32> to vector<8x16xf32>
    %94 = vector.extract_strided_slice %7 {offsets = [0, 96], sizes = [8, 16], strides = [1, 1]} : vector<8x128xf32> to vector<8x16xf32>
    %95 = vector.extract_strided_slice %8 {offsets = [0, 96], sizes = [8, 16], strides = [1, 1]} : vector<8x128xf32> to vector<8x16xf32>
    %cst_29 = arith.constant dense<0.000000e+00> : vector<8x8xf32>
    %96 = tpu.matmul %93, %94, %cst_29 {dimension_numbers = #tpu.dot_dimension_numbers<[1], [1], [0], [0], [0, 0, 1, 0], [], []>} : vector<8x16xf32>, vector<8x16xf32>, vector<8x8xf32> -> vector<8x8xf32>
    %cst_30 = arith.constant dense<0xFF800000> : vector<8xf32>
    %97 = vector.multi_reduction <maximumf>, %96, %cst_30 [1] : vector<8x8xf32> to vector<8xf32>
    %98 = vector.shape_cast %97 : vector<8xf32> to vector<8x1xf32>
    %99 = vector.broadcast %98 : vector<8x1xf32> to vector<8x8xf32>
    %100 = arith.subf %96, %99 : vector<8x8xf32>
    %101 = math.exp %100 : vector<8x8xf32>
    %cst_31 = arith.constant dense<0.000000e+00> : vector<8xf32>
    %102 = vector.multi_reduction <add>, %101, %cst_31 [1] : vector<8x8xf32> to vector<8xf32>
    %103 = vector.shape_cast %102 : vector<8xf32> to vector<8x1xf32>
    %104 = vector.broadcast %103 : vector<8x1xf32> to vector<8x8xf32>
    %105 = arith.divf %101, %104 : vector<8x8xf32>
    %cst_32 = arith.constant dense<0.000000e+00> : vector<8x16xf32>
    %106 = tpu.matmul %105, %95, %cst_32 {dimension_numbers = #tpu.dot_dimension_numbers<[1], [0], [0], [1], [0, 0, 1, 1], [], []>} : vector<8x8xf32>, vector<8x16xf32>, vector<8x16xf32> -> vector<8x16xf32>
    %107 = vector.extract_strided_slice %6 {offsets = [0, 112], sizes = [8, 16], strides = [1, 1]} : vector<8x128xf32> to vector<8x16xf32>
    %108 = vector.extract_strided_slice %7 {offsets = [0, 112], sizes = [8, 16], strides = [1, 1]} : vector<8x128xf32> to vector<8x16xf32>
    %109 = vector.extract_strided_slice %8 {offsets = [0, 112], sizes = [8, 16], strides = [1, 1]} : vector<8x128xf32> to vector<8x16xf32>
    %cst_33 = arith.constant dense<0.000000e+00> : vector<8x8xf32>
    %110 = tpu.matmul %107, %108, %cst_33 {dimension_numbers = #tpu.dot_dimension_numbers<[1], [1], [0], [0], [0, 0, 1, 0], [], []>} : vector<8x16xf32>, vector<8x16xf32>, vector<8x8xf32> -> vector<8x8xf32>
    %cst_34 = arith.constant dense<0xFF800000> : vector<8xf32>
    %111 = vector.multi_reduction <maximumf>, %110, %cst_34 [1] : vector<8x8xf32> to vector<8xf32>
    %112 = vector.shape_cast %111 : vector<8xf32> to vector<8x1xf32>
    %113 = vector.broadcast %112 : vector<8x1xf32> to vector<8x8xf32>
    %114 = arith.subf %110, %113 : vector<8x8xf32>
    %115 = math.exp %114 : vector<8x8xf32>
    %cst_35 = arith.constant dense<0.000000e+00> : vector<8xf32>
    %116 = vector.multi_reduction <add>, %115, %cst_35 [1] : vector<8x8xf32> to vector<8xf32>
    %117 = vector.shape_cast %116 : vector<8xf32> to vector<8x1xf32>
    %118 = vector.broadcast %117 : vector<8x1xf32> to vector<8x8xf32>
    %119 = arith.divf %115, %118 : vector<8x8xf32>
    %cst_36 = arith.constant dense<0.000000e+00> : vector<8x16xf32>
    %120 = tpu.matmul %119, %109, %cst_36 {dimension_numbers = #tpu.dot_dimension_numbers<[1], [0], [0], [1], [0, 0, 1, 1], [], []>} : vector<8x8xf32>, vector<8x16xf32>, vector<8x16xf32> -> vector<8x16xf32>
    %121 = tpu.concatenate %21, %35, %49, %63, %77, %91, %105, %119 in 1 : vector<8x8xf32>, vector<8x8xf32>, vector<8x8xf32>, vector<8x8xf32>, vector<8x8xf32>, vector<8x8xf32>, vector<8x8xf32>, vector<8x8xf32> -> vector<8x64xf32>
    %c0_37 = arith.constant 0 : index
    %c0_38 = arith.constant 0 : index
    %c0_39 = arith.constant 0 : index
    %122 = vector.load %arg6[%c0_37, %c0_38, %c0_39] : memref<1x8x64xf32, #tpu.memory_space<vmem>>, vector<1x8x64xf32>
    %123 = vector.shape_cast %122 : vector<1x8x64xf32> to vector<8x64xf32>
    %124 = vector.shape_cast %121 : vector<8x64xf32> to vector<1x8x64xf32>
    tpu.vector_store %arg6[%c0_37, %c0_38, %c0_39], %124 {strides = array<i32>} : memref<1x8x64xf32, #tpu.memory_space<vmem>>, vector<1x8x64xf32>,
    %125 = tpu.concatenate %22, %36, %50, %64, %78, %92, %106, %120 in 1 : vector<8x16xf32>, vector<8x16xf32>, vector<8x16xf32>, vector<8x16xf32>, vector<8x16xf32>, vector<8x16xf32>, vector<8x16xf32>, vector<8x16xf32> -> vector<8x128xf32>
    %c0_40 = arith.constant 0 : index
    %c0_41 = arith.constant 0 : index
    %126 = vector.load %arg3[%c0_40, %c0_41] : memref<128x32xf32, #tpu.memory_space<vmem>>, vector<128x32xf32>
    %cst_42 = arith.constant dense<0.000000e+00> : vector<8x32xf32>
    %127 = tpu.matmul %125, %126, %cst_42 {dimension_numbers = #tpu.dot_dimension_numbers<[1], [0], [0], [1], [0, 0, 1, 1], [], []>} : vector<8x128xf32>, vector<128x32xf32>, vector<8x32xf32> -> vector<8x32xf32>
    %c0_43 = arith.constant 0 : index
    %c0_44 = arith.constant 0 : index
    %128 = vector.load %arg4[%c0_43, %c0_44] : memref<1x32xf32, #tpu.memory_space<vmem>>, vector<1x32xf32>
    %129 = vector.broadcast %128 : vector<1x32xf32> to vector<8x32xf32>
    %130 = arith.addf %127, %129 : vector<8x32xf32>
    %c0_45 = arith.constant 0 : index
    %c0_46 = arith.constant 0 : index
    %c0_47 = arith.constant 0 : index
    %131 = vector.load %arg5[%c0_45, %c0_46, %c0_47] : memref<1x8x32xf32, #tpu.memory_space<vmem>>, vector<1x8x32xf32>
    %132 = vector.shape_cast %131 : vector<1x8x32xf32> to vector<8x32xf32>
    %133 = vector.shape_cast %130 : vector<8x32xf32> to vector<1x8x32xf32>
    tpu.vector_store %arg5[%c0_45, %c0_46, %c0_47], %133 {strides = array<i32>} : memref<1x8x32xf32, #tpu.memory_space<vmem>>, vector<1x8x32xf32>,
    return
  }
  func.func @transform_0(%arg0: i32) -> (i32, i32, i32) {
    %c0_i32 = arith.constant 0 : i32
    %c0_i32_0 = arith.constant 0 : i32
    %c0_i32_1 = arith.constant 0 : i32
    return %arg0, %c0_i32, %c0_i32_0 : i32, i32, i32
  }
  func.func @transform_1(%arg0: i32) -> (i32, i32) {
    %c0_i32 = arith.constant 0 : i32
    %c0_i32_0 = arith.constant 0 : i32
    %c0_i32_1 = arith.constant 0 : i32
    return %c0_i32, %c0_i32_0 : i32, i32
  }
  func.func @transform_2(%arg0: i32) -> (i32, i32) {
    %c0_i32 = arith.constant 0 : i32
    %c0_i32_0 = arith.constant 0 : i32
    %c0_i32_1 = arith.constant 0 : i32
    return %c0_i32, %c0_i32_0 : i32, i32
  }
  func.func @transform_3(%arg0: i32) -> (i32, i32) {
    %c0_i32 = arith.constant 0 : i32
    %c0_i32_0 = arith.constant 0 : i32
    %c0_i32_1 = arith.constant 0 : i32
    return %c0_i32, %c0_i32_0 : i32, i32
  }
  func.func @transform_4(%arg0: i32) -> (i32, i32, i32) {
    %c0_i32 = arith.constant 0 : i32
    %c0_i32_0 = arith.constant 0 : i32
    %c0_i32_1 = arith.constant 0 : i32
    return %arg0, %c0_i32, %c0_i32_0 : i32, i32, i32
  }
  func.func @transform_5(%arg0: i32) -> (i32, i32, i32) {
    %c0_i32 = arith.constant 0 : i32
    %c0_i32_0 = arith.constant 0 : i32
    %c0_i32_1 = arith.constant 0 : i32
    return %arg0, %c0_i32, %c0_i32_0 : i32, i32, i32
  }
}

</mosaic_0001>

<llo_original>
// kernel: cat_attention.1
$region0: #{cat_attention.1}
  #allocation0 [shape = 'u32[]', space=smem, size = 0x4, offset = 0x4, fixed_abs, tag = 'smem constant byte address 0x4 - core index']
  #allocation1 [shape = 'u32[144,128]{1,0:T(1,128)}', space=vmem, size = 0x12000, scoped, tag = 'internal scratch']
  %s0 = inlined_call_operand.vmem [shape: f32[2,8,32], index: 0, kind: input, shape index: {}]
  %s1 = inlined_call_operand.vmem [shape: f32[32,384], index: 1, kind: input, shape index: {}]
  %s2 = inlined_call_operand.vmem [shape: f32[128,32], index: 2, kind: input, shape index: {}]
  %s3 = inlined_call_operand.vmem [shape: f32[1,32], index: 3, kind: input, shape index: {}]
  %s4 = inlined_call_operand.hbm [shape: f32[2,8,32], index: 4, kind: output, shape index: {0}]
  %s5 = inlined_call_operand.vmem [shape: f32[2,8,64], index: 5, kind: output, shape index: {1}]
  %6 = xla_tuple %s4, %s5
  %s7 = sld [smem:[#allocation0]]
  $region57: #{cat_attention.1} parent=0
    _
  %s9 = ssub.s32 1, %s7
  %s10 = scalar_select 0, %s9, %s7
  $region1: #{cat_attention.1} parent=0
    #allocation2 [shape = 'u8[8192]{0}', space=vmem, size = 0x2000, scoped, tag = 'output window, operand 0']
    #allocation3 [shape = 's32[2]{0}', space=sflag, size = 0x8, scoped, tag = 'scoped memory for cat_attention.1']
    %11 = vsyncpa [#allocation3], 0
    %s12 = scalar_lea.sflag [#allocation3], 1
    %13 = vsyncpa %s12, 0
    loop: start=0, step=1, limit=4
    $region2: #{cat_attention.1} parent=1 // loop_pre_header
      _
    $region3: #{cat_attention.1} parent=1 // loop_header
      %s15 = sphi 0, %s19
      %p16 = scmp.ge.s32.totalorder %s15, 4
      %s25 = sphi 0, %s27
      %s28 = sphi 0, %s25
      %s29 = sphi 0, %s28
      %s45 = sphi 0, %s29
      %s49 = sphi 0, %s49
      %s51 = sphi 0, %s49
      %s52 = sphi 0, %s51
      %s66 = sphi 0, %s52
      %s70 = sphi 0, %s70
      %s72 = sphi 0, %s70
      %s73 = sphi 0, %s72
      %s87 = sphi 0, %s73
      %s91 = sphi 0, %s91
      %s93 = sphi 0, %s91
      %s94 = sphi 0, %s93
      %s108 = sphi 0, %s94
      %s114 = sphi 0, %s116
      %s117 = sphi 0, %s114
      %s118 = sphi 0, %s117
      %s134 = sphi 0, %s118
      %s140 = sphi 0, %s142
      %s143 = sphi 0, %s140
      %s144 = sphi 0, %s143
      %s160 = sphi 0, %s144
    $region4: #{cat_attention.1} parent=1 // loop_header_branch
      %18 = sbr.rel (%p16) target = $region8
    $region5: #{cat_attention.1} parent=1 // loop_body
      %s20 = ssub.s32 %s15, 1
      %s21 = ssub.s32 %s15, 2
      %s22 = sadd.s32 %s15, 1
      %s23 = ssub.s32 %s15, %s22
      %p24 = scmp.eq.s32.totalorder %s23, 0
      %s26 = sadd.s32 %s25, 1
      %s27 = scalar_select %p24, %s25, %s26
      %p30 = pneg %p24
      %p31 = scmp.eq.s32.totalorder %s15, 1
      %p32 = por %p30, %p31
      %p33 = scmp.ne.s32.totalorder %s25, %s28
      %p34 = scmp.eq.s32.totalorder %s15, 0
      %p35 = por %p33, %p34
      %p36 = scmp.ne.s32.totalorder %s25, %s28
      %p37 = scmp.eq.s32.totalorder %s20, 1
      %p38 = por %p36, %p37
      %p39 = scmp.ne.s32.totalorder %s28, %s29
      %p40 = scmp.eq.s32.totalorder %s20, 0
      %p41 = por %p39, %p40
      %p42 = scmp.ne.s32.totalorder %s28, %s29
      %p43 = scmp.eq.s32.totalorder %s21, 1
      %p44 = por %p42, %p43
      %p46 = scmp.ne.s32.totalorder %s29, %s45
      %p47 = scmp.eq.s32.totalorder %s21, 0
      %p48 = por %p46, %p47
      %s50 = sadd.s32 %s49, 1
      %p53 = scmp.eq.s32.totalorder %s15, 1
      %p54 = scmp.ne.s32.totalorder %s49, %s51
      %p55 = scmp.eq.s32.totalorder %s15, 0
      %p56 = por %p54, %p55
      %p57 = scmp.ne.s32.totalorder %s49, %s51
      %p58 = scmp.eq.s32.totalorder %s20, 1
      %p59 = por %p57, %p58
      %p60 = scmp.ne.s32.totalorder %s51, %s52
      %p61 = scmp.eq.s32.totalorder %s20, 0
      %p62 = por %p60, %p61
      %p63 = scmp.ne.s32.totalorder %s51, %s52
      %p64 = scmp.eq.s32.totalorder %s21, 1
      %p65 = por %p63, %p64
      %p67 = scmp.ne.s32.totalorder %s52, %s66
      %p68 = scmp.eq.s32.totalorder %s21, 0
      %p69 = por %p67, %p68
      %s71 = sadd.s32 %s70, 1
      %p74 = scmp.eq.s32.totalorder %s15, 1
      %p75 = scmp.ne.s32.totalorder %s70, %s72
      %p76 = scmp.eq.s32.totalorder %s15, 0
      %p77 = por %p75, %p76
      %p78 = scmp.ne.s32.totalorder %s70, %s72
      %p79 = scmp.eq.s32.totalorder %s20, 1
      %p80 = por %p78, %p79
      %p81 = scmp.ne.s32.totalorder %s72, %s73
      %p82 = scmp.eq.s32.totalorder %s20, 0
      %p83 = por %p81, %p82
      %p84 = scmp.ne.s32.totalorder %s72, %s73
      %p85 = scmp.eq.s32.totalorder %s21, 1
      %p86 = por %p84, %p85
      %p88 = scmp.ne.s32.totalorder %s73, %s87
      %p89 = scmp.eq.s32.totalorder %s21, 0
      %p90 = por %p88, %p89
      %s92 = sadd.s32 %s91, 1
      %p95 = scmp.eq.s32.totalorder %s15, 1
      %p96 = scmp.ne.s32.totalorder %s91, %s93
      %p97 = scmp.eq.s32.totalorder %s15, 0
      %p98 = por %p96, %p97
      %p99 = scmp.ne.s32.totalorder %s91, %s93
      %p100 = scmp.eq.s32.totalorder %s20, 1
      %p101 = por %p99, %p100
      %p102 = scmp.ne.s32.totalorder %s93, %s94
      %p103 = scmp.eq.s32.totalorder %s20, 0
      %p104 = por %p102, %p103
      %p105 = scmp.ne.s32.totalorder %s93, %s94
      %p106 = scmp.eq.s32.totalorder %s21, 1
      %p107 = por %p105, %p106
      %p109 = scmp.ne.s32.totalorder %s94, %s108
      %p110 = scmp.eq.s32.totalorder %s21, 0
      %p111 = por %p109, %p110
      %s112 = ssub.s32 %s15, %s22
      %p113 = scmp.eq.s32.totalorder %s112, 0
      %s115 = sadd.s32 %s114, 1
      %s116 = scalar_select %p113, %s114, %s115
      %p119 = pneg %p113
      %p120 = scmp.eq.s32.totalorder %s15, 1
      %p121 = por %p119, %p120
      %p122 = scmp.ne.s32.totalorder %s114, %s117
      %p123 = scmp.eq.s32.totalorder %s15, 0
      %p124 = por %p122, %p123
      %p125 = scmp.ne.s32.totalorder %s114, %s117
      %p126 = scmp.eq.s32.totalorder %s20, 1
      %p127 = por %p125, %p126
      %p128 = scmp.ne.s32.totalorder %s117, %s118
      %p129 = scmp.eq.s32.totalorder %s20, 0
      %p130 = por %p128, %p129
      %p131 = scmp.ne.s32.totalorder %s117, %s118
      %p132 = scmp.eq.s32.totalorder %s21, 1
      %p133 = por %p131, %p132
      %p135 = scmp.ne.s32.totalorder %s118, %s134
      %p136 = scmp.eq.s32.totalorder %s21, 0
      %p137 = por %p135, %p136
      %s138 = ssub.s32 %s15, %s22
      %p139 = scmp.eq.s32.totalorder %s138, 0
      %s141 = sadd.s32 %s140, 1
      %s142 = scalar_select %p139, %s140, %s141
      %p145 = pneg %p139
      %p146 = scmp.eq.s32.totalorder %s15, 1
      %p147 = por %p145, %p146
      %p148 = scmp.ne.s32.totalorder %s140, %s143
      %p149 = scmp.eq.s32.totalorder %s15, 0
      %p150 = por %p148, %p149
      %p151 = scmp.ne.s32.totalorder %s140, %s143
      %p152 = scmp.eq.s32.totalorder %s20, 1
      %p153 = por %p151, %p152
      %p154 = scmp.ne.s32.totalorder %s143, %s144
      %p155 = scmp.eq.s32.totalorder %s20, 0
      %p156 = por %p154, %p155
      %p157 = scmp.ne.s32.totalorder %s143, %s144
      %p158 = scmp.eq.s32.totalorder %s21, 1
      %p159 = por %p157, %p158
      %p161 = scmp.ne.s32.totalorder %s144, %s160
      %p162 = scmp.eq.s32.totalorder %s21, 0
      %p163 = por %p161, %p162
      %p164 = scmp.le.s32.totalorder 1, %s15
      %p165 = scmp.lt.s32.totalorder %s15, 3
      %p166 = pnand %p164, %p165
      %p167 = pneg %p166
      // Predicated region
      $region9: #{cat_attention.1} parent=5 // pred_check
        _
      $region10: #{cat_attention.1} parent=5 // pred_check_branch
        %169 = sbr.rel (%p166) target = $region12
      $region11: #{cat_attention.1} parent=5 // pred_region
        %s170 = ssub.s32 %s15, 1
        // Predicated region
        $region13: #{cat_attention.1} parent=11 // pred_check
          %p171 = pneg %p62
        $region14: #{cat_attention.1} parent=11 // pred_check_branch
          %173 = sbr.rel (%p171) target = $region16
        $region15: #{cat_attention.1} parent=11 // pred_region
          _
        $region16: #{cat_attention.1} parent=11 // pred_fallthru
          _
        // Predicated region
        $region17: #{cat_attention.1} parent=11 // pred_check
          %p174 = pneg %p83
        $region18: #{cat_attention.1} parent=11 // pred_check_branch
          %176 = sbr.rel (%p174) target = $region20
        $region19: #{cat_attention.1} parent=11 // pred_region
          _
        $region20: #{cat_attention.1} parent=11 // pred_fallthru
          _
        // Predicated region
        $region21: #{cat_attention.1} parent=11 // pred_check
          %p177 = pneg %p104
        $region22: #{cat_attention.1} parent=11 // pred_check_branch
          %179 = sbr.rel (%p177) target = $region24
        $region23: #{cat_attention.1} parent=11 // pred_region
          _
        $region24: #{cat_attention.1} parent=11 // pred_fallthru
          _
      $region12: #{cat_attention.1} parent=5 // pred_fallthru
        _
      %p180 = scmp.lt.s32.totalorder %s15, 2
      // Predicated region
      $region25: #{cat_attention.1} parent=5 // pred_check
        %p181 = pneg %p180
      $region26: #{cat_attention.1} parent=5 // pred_check_branch
        %183 = sbr.rel (%p181) target = $region28
      $region27: #{cat_attention.1} parent=5 // pred_region
        // Predicated region
        $region29: #{cat_attention.1} parent=27 // pred_check
          %p184 = pneg %p35
        $region30: #{cat_attention.1} parent=27 // pred_check_branch
          %186 = sbr.rel (%p184) target = $region32
        $region31: #{cat_attention.1} parent=27 // pred_region
          %p187 = scmp.lt.s32.totalorder %s15, 1
          %s188 = scalar_select %p187, %s15, 1
          %s189 = smul.addr %s188, 8
          %s190 = scalar_lea.vmem %s0, %s189
        $region32: #{cat_attention.1} parent=27 // pred_fallthru
          _
      $region28: #{cat_attention.1} parent=5 // pred_fallthru
        _
      %p191 = scmp.le.s32.totalorder 1, %s15
      %p192 = scmp.lt.s32.totalorder %s15, 3
      %p193 = pnand %p191, %p192
      %p194 = pneg %p193
      // Predicated region
      $region33: #{cat_attention.1} parent=5 // pred_check
        _
      $region34: #{cat_attention.1} parent=5 // pred_check_branch
        %196 = sbr.rel (%p193) target = $region36
      $region35: #{cat_attention.1} parent=5 // pred_region
        %s197 = ssub.s32 %s15, 1
        %p198 = scmp.lt.s32.totalorder %s20, 1
        %s199 = scalar_select %p198, %s20, 1
        %s200 = smul.addr %s199, 8
        %s201 = scalar_lea.vmem %s0, %s200
        %p202 = pneg %p41
        %p203 = pneg %p38
        %p204 = pneg %p62
        %p205 = pneg %p59
        %p206 = pneg %p83
        %p207 = pneg %p80
        %p208 = pneg %p104
        %p209 = pneg %p101
        %p210 = pneg %p130
        %p211 = pneg %p127
        %s212 = sand.u32 %s117, 1
        %s213 = scalar_lea.sflag [#allocation3], %s212
        %s214 = sand.u32 %s117, 1
        %s215 = smul.addr %s214, 8
        %s216 = scalar_lea.vmem [#allocation2], %s215
        %p217 = pneg %p156
        %p218 = pneg %p153
        %p219 = scmp.lt.s32.totalorder %s20, 1
        %s220 = scalar_select %p219, %s20, 1
        %s221 = smul.addr %s220, 8
        %s222 = scalar_lea.vmem %s5, %s221
        %p223 = scmp.lt.s32.totalorder %s20, 1
        %s224 = scalar_select %p223, %s20, 1
        %s225 = smul.addr %s224, 8
        %s226 = scalar_lea.vmem %s0, %s225
        %p227 = scmp.lt.s32.totalorder %s20, 1
        %s228 = scalar_select %p227, %s20, 1
        %s229 = smul.addr %s228, 8
        %s230 = scalar_lea.vmem %s5, %s229
        %v231 = vld [vmem:[%s226] sm:$0xff]
        %v232 = vld [vmem:[%s1] sm:$0xff]
        %v233 = vld [vmem:[%s1 + $0x8] sm:$0xff]
        %v234 = vld [vmem:[%s1 + $0x10] sm:$0xff]
        %v235 = vld [vmem:[%s1 + $0x18] sm:$0xff]
        %v236 = vld [vmem:[%s1 + $0x20] sm:$0xff]
        %v237 = vld [vmem:[%s1 + $0x28] sm:$0xff]
        %v238 = vld [vmem:[%s1 + $0x30] sm:$0xff]
        %v239 = vld [vmem:[%s1 + $0x38] sm:$0xff]
        %v240 = vld [vmem:[%s1 + $0x40] sm:$0xff]
        %v241 = vld [vmem:[%s1 + $0x48] sm:$0xff]
        %v242 = vld [vmem:[%s1 + $0x50] sm:$0xff]
        %v243 = vld [vmem:[%s1 + $0x58] sm:$0xff]
        %vm244 = vcmask 261120
        %v246 = vsel %vm244, %v231, 0
        %248 = vmatprep.subr.mxu0 %v233
        %249 = vmatpush1.msra.mxu0 %v232
        %250 = vmatprep.subr.mxu0 %v236
        %251 = vmatpush1.msra.mxu0 %v235
        %252 = vmatprep.subr.mxu0 %v239
        %253 = vmatpush1.msra.mxu0 %v238
        %254 = vmatprep.subr.mxu0 %v242
        %255 = vmatpush1.msra.mxu0 %v241
        %256 = vmatprep.subr.mxu0 0.0
        %257 = vmatpush1.msra.mxu0 0.0
        %258 = vmatprep.subr.mxu0 0.0
        %259 = vmatpush1.msra.mxu0 0.0
        %260 = vmatprep.subr.mxu0 0.0
        %261 = vmatpush1.msra.mxu0 0.0
        %262 = vmatprep.subr.mxu0 0.0
        %263 = vmatpush1.msra.mxu0 0.0
        %264 = vmatprep.subr.mxu0 0.0
        %265 = vmatpush1.msra.mxu0 0.0
        %266 = vmatprep.subr.mxu0 0.0
        %267 = vmatpush1.msra.mxu0 0.0
        %268 = vmatprep.subr.mxu0 0.0
        %269 = vmatpush1.msra.mxu0 0.0
        %270 = vmatprep.subr.mxu0 0.0
        %271 = vmatpush1.msra.mxu0 0.0
        %272 = vmatprep.subr.mxu0 0.0
        %273 = vmatpush1.msra.mxu0 0.0
        %274 = vmatprep.subr.mxu0 0.0
        %275 = vmatpush1.msra.mxu0 0.0
        %276 = vmatprep.subr.mxu0 0.0
        %277 = vmatpush1.msra.mxu0 0.0
        %278 = vmatprep.subr.mxu0 0.0
        %279 = vmatpush1.msra.mxu0 0.0
        %280 = vmatprep.subr.mxu0 0.0
        %281 = vmatpush1.msra.mxu0 0.0
        %282 = vmatprep.subr.mxu0 0.0
        %283 = vmatpush1.msra.mxu0 0.0
        %284 = vmatprep.subr.mxu0 0.0
        %285 = vmatpush1.msra.mxu0 0.0
        %286 = vmatprep.subr.mxu0 0.0
        %287 = vmatpush1.msra.mxu0 0.0
        %288 = vmatprep.subr.mxu0 0.0
        %289 = vmatpush1.msra.mxu0 0.0
        %290 = vmatprep.subr.mxu0 0.0
        %291 = vmatpush1.msra.mxu0 0.0
        %292 = vmatprep.subr.mxu0 0.0
        %293 = vmatpush1.msra.mxu0 0.0
        %294 = vmatprep.subr.mxu0 0.0
        %295 = vmatpush1.msra.mxu0 0.0
        %296 = vmatprep.subr.mxu0 0.0
        %297 = vmatpush1.msra.mxu0 0.0
        %298 = vmatprep.subr.mxu0 0.0
        %299 = vmatpush1.msra.mxu0 0.0
        %300 = vmatprep.subr.mxu0 0.0
        %301 = vmatpush1.msra.mxu0 0.0
        %302 = vmatprep.subr.mxu0 0.0
        %303 = vmatpush1.msra.mxu0 0.0
        %304 = vmatprep.subr.mxu0 0.0
        %305 = vmatpush1.msra.mxu0 0.0
        %306 = vmatprep.subr.mxu0 0.0
        %307 = vmatpush1.msra.mxu0 0.0
        %308 = vmatprep.subr.mxu0 0.0
        %309 = vmatpush1.msra.mxu0 0.0
        %310 = vmatprep.subr.mxu0 0.0
        %311 = vmatpush1.msra.mxu0 0.0
        %312 = vmatprep.mubr.f32.mxu0 0.0
        %313 = vmatmul.mubr.f32.gmra.mrb[0].mxu0 %v246
        %v314 = vpop.f32.mrb[0].mxu0
        %v315 = vadd.f32 0.0, %v314
        %v316 = vpop.f32.mrb[0].mxu0
        %v317 = vadd.f32 0.0, %v316
        %318 = vdwg.mxu0
        %319 = vmatprep.subr.mxu0 0.0
        %320 = vmatpush1.msra.mxu0 %v234
        %321 = vmatprep.subr.mxu0 0.0
        %322 = vmatpush1.msra.mxu0 %v237
        %323 = vmatprep.subr.mxu0 0.0
        %324 = vmatpush1.msra.mxu0 %v240
        %325 = vmatprep.subr.mxu0 0.0
        %326 = vmatpush1.msra.mxu0 %v243
        %327 = vmatprep.subr.mxu0 0.0
        %328 = vmatpush1.msra.mxu0 0.0
        %329 = vmatprep.subr.mxu0 0.0
        %330 = vmatpush1.msra.mxu0 0.0
        %331 = vmatprep.subr.mxu0 0.0
        %332 = vmatpush1.msra.mxu0 0.0
        %333 = vmatprep.subr.mxu0 0.0
        %334 = vmatpush1.msra.mxu0 0.0
        %335 = vmatprep.subr.mxu0 0.0
        %336 = vmatpush1.msra.mxu0 0.0
        %337 = vmatprep.subr.mxu0 0.0
        %338 = vmatpush1.msra.mxu0 0.0
        %339 = vmatprep.subr.mxu0 0.0
        %340 = vmatpush1.msra.mxu0 0.0
        %341 = vmatprep.subr.mxu0 0.0
        %342 = vmatpush1.msra.mxu0 0.0
        %343 = vmatprep.subr.mxu0 0.0
        %344 = vmatpush1.msra.mxu0 0.0
        %345 = vmatprep.subr.mxu0 0.0
        %346 = vmatpush1.msra.mxu0 0.0
        %347 = vmatprep.subr.mxu0 0.0
        %348 = vmatpush1.msra.mxu0 0.0
        %349 = vmatprep.subr.mxu0 0.0
        %350 = vmatpush1.msra.mxu0 0.0
        %351 = vmatprep.subr.mxu0 0.0
        %352 = vmatpush1.msra.mxu0 0.0
        %353 = vmatprep.subr.mxu0 0.0
        %354 = vmatpush1.msra.mxu0 0.0
        %355 = vmatprep.subr.mxu0 0.0
        %356 = vmatpush1.msra.mxu0 0.0
        %357 = vmatprep.subr.mxu0 0.0
        %358 = vmatpush1.msra.mxu0 0.0
        %359 = vmatprep.subr.mxu0 0.0
        %360 = vmatpush1.msra.mxu0 0.0
        %361 = vmatprep.subr.mxu0 0.0
        %362 = vmatpush1.msra.mxu0 0.0
        %363 = vmatprep.subr.mxu0 0.0
        %364 = vmatpush1.msra.mxu0 0.0
        %365 = vmatprep.subr.mxu0 0.0
        %366 = vmatpush1.msra.mxu0 0.0
        %367 = vmatprep.subr.mxu0 0.0
        %368 = vmatpush1.msra.mxu0 0.0
        %369 = vmatprep.subr.mxu0 0.0
        %370 = vmatpush1.msra.mxu0 0.0
        %371 = vmatprep.subr.mxu0 0.0
        %372 = vmatpush1.msra.mxu0 0.0
        %373 = vmatprep.subr.mxu0 0.0
        %374 = vmatpush1.msra.mxu0 0.0
        %375 = vmatprep.subr.mxu0 0.0
        %376 = vmatpush1.msra.mxu0 0.0
        %377 = vmatprep.subr.mxu0 0.0
        %378 = vmatpush1.msra.mxu0 0.0
        %379 = vmatprep.subr.mxu0 0.0
        %380 = vmatpush1.msra.mxu0 0.0
        %381 = vmatprep.subr.mxu0 0.0
        %382 = vmatpush1.msra.mxu0 0.0
        %383 = vmatprep.mubr.f32.mxu0 0.0
        %384 = vmatmul.mubr.f32.gmra.mrb[0].mxu0 %v246
        %v385 = vpop.f32.mrb[0].mxu0
        %v386 = vadd.f32 0.0, %v385
        %v387 = vpop.f32.mrb[0].mxu0
        %388 = vdwg.mxu0
        %v389 = vmul.f32 %v315, 0.25
        %vm390 = vcmask 130048
        %v392 = vsel %vm390, %v389, 0
        %v395 = vsel %vm390, %v317, 0
        %397 = vmatprep.subr.mxu0 0.0
        %398 = vmatpush1.xpose.msra.mxu0 %v395
        %399 = vmatprep.subr.mxu0 0.0
        %400 = vmatpush1.xpose.msra.mxu0 0.0
        %401 = vmatprep.subr.mxu0 0.0
        %402 = vmatpush1.xpose.msra.mxu0 0.0
        %403 = vmatprep.subr.mxu0 0.0
        %404 = vmatpush1.xpose.msra.mxu0 0.0
        %405 = vmatprep.subr.mxu0 0.0
        %406 = vmatpush1.xpose.msra.mxu0 0.0
        %407 = vmatprep.subr.mxu0 0.0
        %408 = vmatpush1.xpose.msra.mxu0 0.0
        %409 = vmatprep.subr.mxu0 0.0
        %410 = vmatpush1.xpose.msra.mxu0 0.0
        %411 = vmatprep.subr.mxu0 0.0
        %412 = vmatpush1.xpose.msra.mxu0 0.0
        %413 = vmatprep.subr.mxu0 0.0
        %414 = vmatpush1.xpose.msra.mxu0 0.0
        %415 = vmatprep.subr.mxu0 0.0
        %416 = vmatpush1.xpose.msra.mxu0 0.0
        %417 = vmatprep.subr.mxu0 0.0
        %418 = vmatpush1.xpose.msra.mxu0 0.0
        %419 = vmatprep.subr.mxu0 0.0
        %420 = vmatpush1.xpose.msra.mxu0 0.0
        %421 = vmatprep.subr.mxu0 0.0
        %422 = vmatpush1.xpose.msra.mxu0 0.0
        %423 = vmatprep.subr.mxu0 0.0
        %424 = vmatpush1.xpose.msra.mxu0 0.0
        %425 = vmatprep.subr.mxu0 0.0
        %426 = vmatpush1.xpose.msra.mxu0 0.0
        %427 = vmatprep.subr.mxu0 0.0
        %428 = vmatpush1.xpose.msra.mxu0 0.0
        %429 = vmatprep.subr.mxu0 0.0
        %430 = vmatpush1.xpose.msra.mxu0 0.0
        %431 = vmatprep.subr.mxu0 0.0
        %432 = vmatpush1.xpose.msra.mxu0 0.0
        %433 = vmatprep.subr.mxu0 0.0
        %434 = vmatpush1.xpose.msra.mxu0 0.0
        %435 = vmatprep.subr.mxu0 0.0
        %436 = vmatpush1.xpose.msra.mxu0 0.0
        %437 = vmatprep.subr.mxu0 0.0
        %438 = vmatpush1.xpose.msra.mxu0 0.0
        %439 = vmatprep.subr.mxu0 0.0
        %440 = vmatpush1.xpose.msra.mxu0 0.0
        %441 = vmatprep.subr.mxu0 0.0
        %442 = vmatpush1.xpose.msra.mxu0 0.0
        %443 = vmatprep.subr.mxu0 0.0
        %444 = vmatpush1.xpose.msra.mxu0 0.0
        %445 = vmatprep.subr.mxu0 0.0
        %446 = vmatpush1.xpose.msra.mxu0 0.0
        %447 = vmatprep.subr.mxu0 0.0
        %448 = vmatpush1.xpose.msra.mxu0 0.0
        %449 = vmatprep.subr.mxu0 0.0
        %450 = vmatpush1.xpose.msra.mxu0 0.0
        %451 = vmatprep.subr.mxu0 0.0
        %452 = vmatpush1.xpose.msra.mxu0 0.0
        %453 = vmatprep.subr.mxu0 0.0
        %454 = vmatpush1.xpose.msra.mxu0 0.0
        %455 = vmatprep.subr.mxu0 0.0
        %456 = vmatpush1.xpose.msra.mxu0 0.0
        %457 = vmatprep.subr.mxu0 0.0
        %458 = vmatpush1.xpose.msra.mxu0 0.0
        %459 = vmatprep.subr.mxu0 0.0
        %460 = vmatpush1.xpose.msra.mxu0 0.0
        %461 = vmatprep.mubr.f32.mxu0 0.0
        %462 = vmatmul.mubr.f32.gmra.mrb[0].mxu0 %v392
        %v463 = vpop.f32.mrb[0].mxu0
        %v464 = vadd.f32 0.0, %v463
        %v465 = vpop.f32.mrb[0].mxu0
        %466 = vdwg.mxu0
        %vm467 = vcmask 64512
        %v468 = vsel %vm467, %v464, -inf
        %469 = vmax.xlane.f32.xlu0 %v468
        %v470 = vpop.xlane.xlu0 %469
        %v471 = vsub.f32 %v464, %v470
        %v472 = vmul.f32 %v471, 1.442695
        %v473 = vpow.pop %v472
        %v474 = vsel %vm467, %v473, 0.0
        %475 = vadd.xlane.f32.xlu0 %v474
        %v476 = vpop.xlane.xlu0 %475
        %v477 = vrcp.pop %v476
        %v478 = vmul.f32 %v473, %v477
        %v480 = vsel %vm467, %v478, 0
        %482 = vmatprep.subr.mxu0 0.0
        %483 = vmatpush1.msra.mxu0 %v386
        %484 = vmatprep.subr.mxu0 0.0
        %485 = vmatpush1.msra.mxu0 0.0
        %486 = vmatprep.subr.mxu0 0.0
        %487 = vmatpush1.msra.mxu0 0.0
        %488 = vmatprep.subr.mxu0 0.0
        %489 = vmatpush1.msra.mxu0 0.0
        %490 = vmatprep.subr.mxu0 0.0
        %491 = vmatpush1.msra.mxu0 0.0
        %492 = vmatprep.subr.mxu0 0.0
        %493 = vmatpush1.msra.mxu0 0.0
        %494 = vmatprep.subr.mxu0 0.0
        %495 = vmatpush1.msra.mxu0 0.0
        %496 = vmatprep.subr.mxu0 0.0
        %497 = vmatpush1.msra.mxu0 0.0
        %498 = vmatprep.subr.mxu0 0.0
        %499 = vmatpush1.msra.mxu0 0.0
        %500 = vmatprep.subr.mxu0 0.0
        %501 = vmatpush1.msra.mxu0 0.0
        %502 = vmatprep.subr.mxu0 0.0
        %503 = vmatpush1.msra.mxu0 0.0
        %504 = vmatprep.subr.mxu0 0.0
        %505 = vmatpush1.msra.mxu0 0.0
        %506 = vmatprep.subr.mxu0 0.0
        %507 = vmatpush1.msra.mxu0 0.0
        %508 = vmatprep.subr.mxu0 0.0
        %509 = vmatpush1.msra.mxu0 0.0
        %510 = vmatprep.subr.mxu0 0.0
        %511 = vmatpush1.msra.mxu0 0.0
        %512 = vmatprep.subr.mxu0 0.0
        %513 = vmatpush1.msra.mxu0 0.0
        %514 = vmatprep.subr.mxu0 0.0
        %515 = vmatpush1.msra.mxu0 0.0
        %516 = vmatprep.subr.mxu0 0.0
        %517 = vmatpush1.msra.mxu0 0.0
        %518 = vmatprep.subr.mxu0 0.0
        %519 = vmatpush1.msra.mxu0 0.0
        %520 = vmatprep.subr.mxu0 0.0
        %521 = vmatpush1.msra.mxu0 0.0
        %522 = vmatprep.subr.mxu0 0.0
        %523 = vmatpush1.msra.mxu0 0.0
        %524 = vmatprep.subr.mxu0 0.0
        %525 = vmatpush1.msra.mxu0 0.0
        %526 = vmatprep.subr.mxu0 0.0
        %527 = vmatpush1.msra.mxu0 0.0
        %528 = vmatprep.subr.mxu0 0.0
        %529 = vmatpush1.msra.mxu0 0.0
        %530 = vmatprep.subr.mxu0 0.0
        %531 = vmatpush1.msra.mxu0 0.0
        %532 = vmatprep.subr.mxu0 0.0
        %533 = vmatpush1.msra.mxu0 0.0
        %534 = vmatprep.subr.mxu0 0.0
        %535 = vmatpush1.msra.mxu0 0.0
        %536 = vmatprep.subr.mxu0 0.0
        %537 = vmatpush1.msra.mxu0 0.0
        %538 = vmatprep.subr.mxu0 0.0
        %539 = vmatpush1.msra.mxu0 0.0
        %540 = vmatprep.subr.mxu0 0.0
        %541 = vmatpush1.msra.mxu0 0.0
        %542 = vmatprep.subr.mxu0 0.0
        %543 = vmatpush1.msra.mxu0 0.0
        %544 = vmatprep.subr.mxu0 0.0
        %545 = vmatpush1.msra.mxu0 0.0
        %546 = vmatprep.mubr.f32.mxu0 0.0
        %547 = vmatmul.mubr.f32.gmra.mrb[0].mxu0 %v480
        %v548 = vpop.f32.mrb[0].mxu0
        %v549 = vadd.f32 0.0, %v548
        %v550 = vpop.f32.mrb[0].mxu0
        %551 = vdwg.mxu0
        %552 = vrot.lane.b32.xlu0 %v389, 112
        %v553 = vpop.permute.xlu0 %552
        %554 = vrot.lane.b32.xlu0 %v317, 112
        %v555 = vpop.permute.xlu0 %554
        %v556 = vsel %vm390, %v553, 0
        %v558 = vsel %vm390, %v555, 0
        %560 = vmatprep.subr.mxu0 0.0
        %561 = vmatpush1.xpose.msra.mxu0 %v558
        %562 = vmatprep.subr.mxu0 0.0
        %563 = vmatpush1.xpose.msra.mxu0 0.0
        %564 = vmatprep.subr.mxu0 0.0
        %565 = vmatpush1.xpose.msra.mxu0 0.0
        %566 = vmatprep.subr.mxu0 0.0
        %567 = vmatpush1.xpose.msra.mxu0 0.0
        %568 = vmatprep.subr.mxu0 0.0
        %569 = vmatpush1.xpose.msra.mxu0 0.0
        %570 = vmatprep.subr.mxu0 0.0
        %571 = vmatpush1.xpose.msra.mxu0 0.0
        %572 = vmatprep.subr.mxu0 0.0
        %573 = vmatpush1.xpose.msra.mxu0 0.0
        %574 = vmatprep.subr.mxu0 0.0
        %575 = vmatpush1.xpose.msra.mxu0 0.0
        %576 = vmatprep.subr.mxu0 0.0
        %577 = vmatpush1.xpose.msra.mxu0 0.0
        %578 = vmatprep.subr.mxu0 0.0
        %579 = vmatpush1.xpose.msra.mxu0 0.0
        %580 = vmatprep.subr.mxu0 0.0
        %581 = vmatpush1.xpose.msra.mxu0 0.0
        %582 = vmatprep.subr.mxu0 0.0
        %583 = vmatpush1.xpose.msra.mxu0 0.0
        %584 = vmatprep.subr.mxu0 0.0
        %585 = vmatpush1.xpose.msra.mxu0 0.0
        %586 = vmatprep.subr.mxu0 0.0
        %587 = vmatpush1.xpose.msra.mxu0 0.0
        %588 = vmatprep.subr.mxu0 0.0
        %589 = vmatpush1.xpose.msra.mxu0 0.0
        %590 = vmatprep.subr.mxu0 0.0
        %591 = vmatpush1.xpose.msra.mxu0 0.0
        %592 = vmatprep.subr.mxu0 0.0
        %593 = vmatpush1.xpose.msra.mxu0 0.0
        %594 = vmatprep.subr.mxu0 0.0
        %595 = vmatpush1.xpose.msra.mxu0 0.0
        %596 = vmatprep.subr.mxu0 0.0
        %597 = vmatpush1.xpose.msra.mxu0 0.0
        %598 = vmatprep.subr.mxu0 0.0
        %599 = vmatpush1.xpose.msra.mxu0 0.0
        %600 = vmatprep.subr.mxu0 0.0
        %601 = vmatpush1.xpose.msra.mxu0 0.0
        %602 = vmatprep.subr.mxu0 0.0
        %603 = vmatpush1.xpose.msra.mxu0 0.0
        %604 = vmatprep.subr.mxu0 0.0
        %605 = vmatpush1.xpose.msra.mxu0 0.0
        %606 = vmatprep.subr.mxu0 0.0
        %607 = vmatpush1.xpose.msra.mxu0 0.0
        %608 = vmatprep.subr.mxu0 0.0
        %609 = vmatpush1.xpose.msra.mxu0 0.0
        %610 = vmatprep.subr.mxu0 0.0
        %611 = vmatpush1.xpose.msra.mxu0 0.0
        %612 = vmatprep.subr.mxu0 0.0
        %613 = vmatpush1.xpose.msra.mxu0 0.0
        %614 = vmatprep.subr.mxu0 0.0
        %615 = vmatpush1.xpose.msra.mxu0 0.0
        %616 = vmatprep.subr.mxu0 0.0
        %617 = vmatpush1.xpose.msra.mxu0 0.0
        %618 = vmatprep.subr.mxu0 0.0
        %619 = vmatpush1.xpose.msra.mxu0 0.0
        %620 = vmatprep.subr.mxu0 0.0
        %621 = vmatpush1.xpose.msra.mxu0 0.0
        %622 = vmatprep.subr.mxu0 0.0
        %623 = vmatpush1.xpose.msra.mxu0 0.0
        %624 = vmatprep.mubr.f32.mxu0 0.0
        %625 = vmatmul.mubr.f32.gmra.mrb[0].mxu0 %v556
        %v626 = vpop.f32.mrb[0].mxu0
        %v627 = vadd.f32 0.0, %v626
        %v628 = vpop.f32.mrb[0].mxu0
        %629 = vdwg.mxu0
        %v630 = vsel %vm467, %v627, -inf
        %631 = vmax.xlane.f32.xlu0 %v630
        %v632 = vpop.xlane.xlu0 %631
        %v633 = vsub.f32 %v627, %v632
        %v634 = vmul.f32 %v633, 1.442695
        %v635 = vpow.pop %v634
        %v636 = vsel %vm467, %v635, 0.0
        %637 = vadd.xlane.f32.xlu0 %v636
        %v638 = vpop.xlane.xlu0 %637
        %v639 = vrcp.pop %v638
        %v640 = vmul.f32 %v635, %v639
        %642 = vrot.lane.b32.xlu0 %v386, 112
        %v643 = vpop.permute.xlu0 %642
        %v646 = vsel %vm467, %v640, 0
        %648 = vmatprep.subr.mxu0 0.0
        %649 = vmatpush1.msra.mxu0 %v643
        %650 = vmatprep.subr.mxu0 0.0
        %651 = vmatpush1.msra.mxu0 0.0
        %652 = vmatprep.subr.mxu0 0.0
        %653 = vmatpush1.msra.mxu0 0.0
        %654 = vmatprep.subr.mxu0 0.0
        %655 = vmatpush1.msra.mxu0 0.0
        %656 = vmatprep.subr.mxu0 0.0
        %657 = vmatpush1.msra.mxu0 0.0
        %658 = vmatprep.subr.mxu0 0.0
        %659 = vmatpush1.msra.mxu0 0.0
        %660 = vmatprep.subr.mxu0 0.0
        %661 = vmatpush1.msra.mxu0 0.0
        %662 = vmatprep.subr.mxu0 0.0
        %663 = vmatpush1.msra.mxu0 0.0
        %664 = vmatprep.subr.mxu0 0.0
        %665 = vmatpush1.msra.mxu0 0.0
        %666 = vmatprep.subr.mxu0 0.0
        %667 = vmatpush1.msra.mxu0 0.0
        %668 = vmatprep.subr.mxu0 0.0
        %669 = vmatpush1.msra.mxu0 0.0
        %670 = vmatprep.subr.mxu0 0.0
        %671 = vmatpush1.msra.mxu0 0.0
        %672 = vmatprep.subr.mxu0 0.0
        %673 = vmatpush1.msra.mxu0 0.0
        %674 = vmatprep.subr.mxu0 0.0
        %675 = vmatpush1.msra.mxu0 0.0
        %676 = vmatprep.subr.mxu0 0.0
        %677 = vmatpush1.msra.mxu0 0.0
        %678 = vmatprep.subr.mxu0 0.0
        %679 = vmatpush1.msra.mxu0 0.0
        %680 = vmatprep.subr.mxu0 0.0
        %681 = vmatpush1.msra.mxu0 0.0
        %682 = vmatprep.subr.mxu0 0.0
        %683 = vmatpush1.msra.mxu0 0.0
        %684 = vmatprep.subr.mxu0 0.0
        %685 = vmatpush1.msra.mxu0 0.0
        %686 = vmatprep.subr.mxu0 0.0
        %687 = vmatpush1.msra.mxu0 0.0
        %688 = vmatprep.subr.mxu0 0.0
        %689 = vmatpush1.msra.mxu0 0.0
        %690 = vmatprep.subr.mxu0 0.0
        %691 = vmatpush1.msra.mxu0 0.0
        %692 = vmatprep.subr.mxu0 0.0
        %693 = vmatpush1.msra.mxu0 0.0
        %694 = vmatprep.subr.mxu0 0.0
        %695 = vmatpush1.msra.mxu0 0.0
        %696 = vmatprep.subr.mxu0 0.0
        %697 = vmatpush1.msra.mxu0 0.0
        %698 = vmatprep.subr.mxu0 0.0
        %699 = vmatpush1.msra.mxu0 0.0
        %700 = vmatprep.subr.mxu0 0.0
        %701 = vmatpush1.msra.mxu0 0.0
        %702 = vmatprep.subr.mxu0 0.0
        %703 = vmatpush1.msra.mxu0 0.0
        %704 = vmatprep.subr.mxu0 0.0
        %705 = vmatpush1.msra.mxu0 0.0
        %706 = vmatprep.subr.mxu0 0.0
        %707 = vmatpush1.msra.mxu0 0.0
        %708 = vmatprep.subr.mxu0 0.0
        %709 = vmatpush1.msra.mxu0 0.0
        %710 = vmatprep.subr.mxu0 0.0
        %711 = vmatpush1.msra.mxu0 0.0
        %712 = vmatprep.mubr.f32.mxu0 0.0
        %713 = vmatmul.mubr.f32.gmra.mrb[0].mxu0 %v646
        %v714 = vpop.f32.mrb[0].mxu0
        %v715 = vadd.f32 0.0, %v714
        %v716 = vpop.f32.mrb[0].mxu0
        %717 = vdwg.mxu0
        %718 = vrot.lane.b32.xlu0 %v389, 96
        %v719 = vpop.permute.xlu0 %718
        %720 = vrot.lane.b32.xlu0 %v317, 96
        %v721 = vpop.permute.xlu0 %720
        %v722 = vsel %vm390, %v719, 0
        %v724 = vsel %vm390, %v721, 0
        %726 = vmatprep.subr.mxu0 0.0
        %727 = vmatpush1.xpose.msra.mxu0 %v724
        %728 = vmatprep.subr.mxu0 0.0
        %729 = vmatpush1.xpose.msra.mxu0 0.0
        %730 = vmatprep.subr.mxu0 0.0
        %731 = vmatpush1.xpose.msra.mxu0 0.0
        %732 = vmatprep.subr.mxu0 0.0
        %733 = vmatpush1.xpose.msra.mxu0 0.0
        %734 = vmatprep.subr.mxu0 0.0
        %735 = vmatpush1.xpose.msra.mxu0 0.0
        %736 = vmatprep.subr.mxu0 0.0
        %737 = vmatpush1.xpose.msra.mxu0 0.0
        %738 = vmatprep.subr.mxu0 0.0
        %739 = vmatpush1.xpose.msra.mxu0 0.0
        %740 = vmatprep.subr.mxu0 0.0
        %741 = vmatpush1.xpose.msra.mxu0 0.0
        %742 = vmatprep.subr.mxu0 0.0
        %743 = vmatpush1.xpose.msra.mxu0 0.0
        %744 = vmatprep.subr.mxu0 0.0
        %745 = vmatpush1.xpose.msra.mxu0 0.0
        %746 = vmatprep.subr.mxu0 0.0
        %747 = vmatpush1.xpose.msra.mxu0 0.0
        %748 = vmatprep.subr.mxu0 0.0
        %749 = vmatpush1.xpose.msra.mxu0 0.0
        %750 = vmatprep.subr.mxu0 0.0
        %751 = vmatpush1.xpose.msra.mxu0 0.0
        %752 = vmatprep.subr.mxu0 0.0
        %753 = vmatpush1.xpose.msra.mxu0 0.0
        %754 = vmatprep.subr.mxu0 0.0
        %755 = vmatpush1.xpose.msra.mxu0 0.0
        %756 = vmatprep.subr.mxu0 0.0
        %757 = vmatpush1.xpose.msra.mxu0 0.0
        %758 = vmatprep.subr.mxu0 0.0
        %759 = vmatpush1.xpose.msra.mxu0 0.0
        %760 = vmatprep.subr.mxu0 0.0
        %761 = vmatpush1.xpose.msra.mxu0 0.0
        %762 = vmatprep.subr.mxu0 0.0
        %763 = vmatpush1.xpose.msra.mxu0 0.0
        %764 = vmatprep.subr.mxu0 0.0
        %765 = vmatpush1.xpose.msra.mxu0 0.0
        %766 = vmatprep.subr.mxu0 0.0
        %767 = vmatpush1.xpose.msra.mxu0 0.0
        %768 = vmatprep.subr.mxu0 0.0
        %769 = vmatpush1.xpose.msra.mxu0 0.0
        %770 = vmatprep.subr.mxu0 0.0
        %771 = vmatpush1.xpose.msra.mxu0 0.0
        %772 = vmatprep.subr.mxu0 0.0
        %773 = vmatpush1.xpose.msra.mxu0 0.0
        %774 = vmatprep.subr.mxu0 0.0
        %775 = vmatpush1.xpose.msra.mxu0 0.0
        %776 = vmatprep.subr.mxu0 0.0
        %777 = vmatpush1.xpose.msra.mxu0 0.0
        %778 = vmatprep.subr.mxu0 0.0
        %779 = vmatpush1.xpose.msra.mxu0 0.0
        %780 = vmatprep.subr.mxu0 0.0
        %781 = vmatpush1.xpose.msra.mxu0 0.0
        %782 = vmatprep.subr.mxu0 0.0
        %783 = vmatpush1.xpose.msra.mxu0 0.0
        %784 = vmatprep.subr.mxu0 0.0
        %785 = vmatpush1.xpose.msra.mxu0 0.0
        %786 = vmatprep.subr.mxu0 0.0
        %787 = vmatpush1.xpose.msra.mxu0 0.0
        %788 = vmatprep.subr.mxu0 0.0
        %789 = vmatpush1.xpose.msra.mxu0 0.0
        %790 = vmatprep.mubr.f32.mxu0 0.0
        %791 = vmatmul.mubr.f32.gmra.mrb[0].mxu0 %v722
        %v792 = vpop.f32.mrb[0].mxu0
        %v793 = vadd.f32 0.0, %v792
        %v794 = vpop.f32.mrb[0].mxu0
        %795 = vdwg.mxu0
        %v796 = vsel %vm467, %v793, -inf
        %797 = vmax.xlane.f32.xlu0 %v796
        %v798 = vpop.xlane.xlu0 %797
        %v799 = vsub.f32 %v793, %v798
        %v800 = vmul.f32 %v799, 1.442695
        %v801 = vpow.pop %v800
        %v802 = vsel %vm467, %v801, 0.0
        %803 = vadd.xlane.f32.xlu0 %v802
        %v804 = vpop.xlane.xlu0 %803
        %v805 = vrcp.pop %v804
        %v806 = vmul.f32 %v801, %v805
        %807 = vrot.lane.b32.xlu0 %v386, 96
        %v808 = vpop.permute.xlu0 %807
        %v811 = vsel %vm467, %v806, 0
        %813 = vmatprep.subr.mxu0 0.0
        %814 = vmatpush1.msra.mxu0 %v808
        %815 = vmatprep.subr.mxu0 0.0
        %816 = vmatpush1.msra.mxu0 0.0
        %817 = vmatprep.subr.mxu0 0.0
        %818 = vmatpush1.msra.mxu0 0.0
        %819 = vmatprep.subr.mxu0 0.0
        %820 = vmatpush1.msra.mxu0 0.0
        %821 = vmatprep.subr.mxu0 0.0
        %822 = vmatpush1.msra.mxu0 0.0
        %823 = vmatprep.subr.mxu0 0.0
        %824 = vmatpush1.msra.mxu0 0.0
        %825 = vmatprep.subr.mxu0 0.0
        %826 = vmatpush1.msra.mxu0 0.0
        %827 = vmatprep.subr.mxu0 0.0
        %828 = vmatpush1.msra.mxu0 0.0
        %829 = vmatprep.subr.mxu0 0.0
        %830 = vmatpush1.msra.mxu0 0.0
        %831 = vmatprep.subr.mxu0 0.0
        %832 = vmatpush1.msra.mxu0 0.0
        %833 = vmatprep.subr.mxu0 0.0
        %834 = vmatpush1.msra.mxu0 0.0
        %835 = vmatprep.subr.mxu0 0.0
        %836 = vmatpush1.msra.mxu0 0.0
        %837 = vmatprep.subr.mxu0 0.0
        %838 = vmatpush1.msra.mxu0 0.0
        %839 = vmatprep.subr.mxu0 0.0
        %840 = vmatpush1.msra.mxu0 0.0
        %841 = vmatprep.subr.mxu0 0.0
        %842 = vmatpush1.msra.mxu0 0.0
        %843 = vmatprep.subr.mxu0 0.0
        %844 = vmatpush1.msra.mxu0 0.0
        %845 = vmatprep.subr.mxu0 0.0
        %846 = vmatpush1.msra.mxu0 0.0
        %847 = vmatprep.subr.mxu0 0.0
        %848 = vmatpush1.msra.mxu0 0.0
        %849 = vmatprep.subr.mxu0 0.0
        %850 = vmatpush1.msra.mxu0 0.0
        %851 = vmatprep.subr.mxu0 0.0
        %852 = vmatpush1.msra.mxu0 0.0
        %853 = vmatprep.subr.mxu0 0.0
        %854 = vmatpush1.msra.mxu0 0.0
        %855 = vmatprep.subr.mxu0 0.0
        %856 = vmatpush1.msra.mxu0 0.0
        %857 = vmatprep.subr.mxu0 0.0
        %858 = vmatpush1.msra.mxu0 0.0
        %859 = vmatprep.subr.mxu0 0.0
        %860 = vmatpush1.msra.mxu0 0.0
        %861 = vmatprep.subr.mxu0 0.0
        %862 = vmatpush1.msra.mxu0 0.0
        %863 = vmatprep.subr.mxu0 0.0
        %864 = vmatpush1.msra.mxu0 0.0
        %865 = vmatprep.subr.mxu0 0.0
        %866 = vmatpush1.msra.mxu0 0.0
        %867 = vmatprep.subr.mxu0 0.0
        %868 = vmatpush1.msra.mxu0 0.0
        %869 = vmatprep.subr.mxu0 0.0
        %870 = vmatpush1.msra.mxu0 0.0
        %871 = vmatprep.subr.mxu0 0.0
        %872 = vmatpush1.msra.mxu0 0.0
        %873 = vmatprep.subr.mxu0 0.0
        %874 = vmatpush1.msra.mxu0 0.0
        %875 = vmatprep.subr.mxu0 0.0
        %876 = vmatpush1.msra.mxu0 0.0
        %877 = vmatprep.mubr.f32.mxu0 0.0
        %878 = vmatmul.mubr.f32.gmra.mrb[0].mxu0 %v811
        %v879 = vpop.f32.mrb[0].mxu0
        %v880 = vadd.f32 0.0, %v879
        %v881 = vpop.f32.mrb[0].mxu0
        %882 = vdwg.mxu0
        %883 = vrot.lane.b32.xlu0 %v389, 80
        %v884 = vpop.permute.xlu0 %883
        %885 = vrot.lane.b32.xlu0 %v317, 80
        %v886 = vpop.permute.xlu0 %885
        %v887 = vsel %vm390, %v884, 0
        %v889 = vsel %vm390, %v886, 0
        %891 = vmatprep.subr.mxu0 0.0
        %892 = vmatpush1.xpose.msra.mxu0 %v889
        %893 = vmatprep.subr.mxu0 0.0
        %894 = vmatpush1.xpose.msra.mxu0 0.0
        %895 = vmatprep.subr.mxu0 0.0
        %896 = vmatpush1.xpose.msra.mxu0 0.0
        %897 = vmatprep.subr.mxu0 0.0
        %898 = vmatpush1.xpose.msra.mxu0 0.0
        %899 = vmatprep.subr.mxu0 0.0
        %900 = vmatpush1.xpose.msra.mxu0 0.0
        %901 = vmatprep.subr.mxu0 0.0
        %902 = vmatpush1.xpose.msra.mxu0 0.0
        %903 = vmatprep.subr.mxu0 0.0
        %904 = vmatpush1.xpose.msra.mxu0 0.0
        %905 = vmatprep.subr.mxu0 0.0
        %906 = vmatpush1.xpose.msra.mxu0 0.0
        %907 = vmatprep.subr.mxu0 0.0
        %908 = vmatpush1.xpose.msra.mxu0 0.0
        %909 = vmatprep.subr.mxu0 0.0
        %910 = vmatpush1.xpose.msra.mxu0 0.0
        %911 = vmatprep.subr.mxu0 0.0
        %912 = vmatpush1.xpose.msra.mxu0 0.0
        %913 = vmatprep.subr.mxu0 0.0
        %914 = vmatpush1.xpose.msra.mxu0 0.0
        %915 = vmatprep.subr.mxu0 0.0
        %916 = vmatpush1.xpose.msra.mxu0 0.0
        %917 = vmatprep.subr.mxu0 0.0
        %918 = vmatpush1.xpose.msra.mxu0 0.0
        %919 = vmatprep.subr.mxu0 0.0
        %920 = vmatpush1.xpose.msra.mxu0 0.0
        %921 = vmatprep.subr.mxu0 0.0
        %922 = vmatpush1.xpose.msra.mxu0 0.0
        %923 = vmatprep.subr.mxu0 0.0
        %924 = vmatpush1.xpose.msra.mxu0 0.0
        %925 = vmatprep.subr.mxu0 0.0
        %926 = vmatpush1.xpose.msra.mxu0 0.0
        %927 = vmatprep.subr.mxu0 0.0
        %928 = vmatpush1.xpose.msra.mxu0 0.0
        %929 = vmatprep.subr.mxu0 0.0
        %930 = vmatpush1.xpose.msra.mxu0 0.0
        %931 = vmatprep.subr.mxu0 0.0
        %932 = vmatpush1.xpose.msra.mxu0 0.0
        %933 = vmatprep.subr.mxu0 0.0
        %934 = vmatpush1.xpose.msra.mxu0 0.0
        %935 = vmatprep.subr.mxu0 0.0
        %936 = vmatpush1.xpose.msra.mxu0 0.0
        %937 = vmatprep.subr.mxu0 0.0
        %938 = vmatpush1.xpose.msra.mxu0 0.0
        %939 = vmatprep.subr.mxu0 0.0
        %940 = vmatpush1.xpose.msra.mxu0 0.0
        %941 = vmatprep.subr.mxu0 0.0
        %942 = vmatpush1.xpose.msra.mxu0 0.0
        %943 = vmatprep.subr.mxu0 0.0
        %944 = vmatpush1.xpose.msra.mxu0 0.0
        %945 = vmatprep.subr.mxu0 0.0
        %946 = vmatpush1.xpose.msra.mxu0 0.0
        %947 = vmatprep.subr.mxu0 0.0
        %948 = vmatpush1.xpose.msra.mxu0 0.0
        %949 = vmatprep.subr.mxu0 0.0
        %950 = vmatpush1.xpose.msra.mxu0 0.0
        %951 = vmatprep.subr.mxu0 0.0
        %952 = vmatpush1.xpose.msra.mxu0 0.0
        %953 = vmatprep.subr.mxu0 0.0
        %954 = vmatpush1.xpose.msra.mxu0 0.0
        %955 = vmatprep.mubr.f32.mxu0 0.0
        %956 = vmatmul.mubr.f32.gmra.mrb[0].mxu0 %v887
        %v957 = vpop.f32.mrb[0].mxu0
        %v958 = vadd.f32 0.0, %v957
        %v959 = vpop.f32.mrb[0].mxu0
        %960 = vdwg.mxu0
        %v961 = vsel %vm467, %v958, -inf
        %962 = vmax.xlane.f32.xlu0 %v961
        %v963 = vpop.xlane.xlu0 %962
        %v964 = vsub.f32 %v958, %v963
        %v965 = vmul.f32 %v964, 1.442695
        %v966 = vpow.pop %v965
        %v967 = vsel %vm467, %v966, 0.0
        %968 = vadd.xlane.f32.xlu0 %v967
        %v969 = vpop.xlane.xlu0 %968
        %v970 = vrcp.pop %v969
        %v971 = vmul.f32 %v966, %v970
        %972 = vrot.lane.b32.xlu0 %v386, 80
        %v973 = vpop.permute.xlu0 %972
        %v976 = vsel %vm467, %v971, 0
        %978 = vmatprep.subr.mxu0 0.0
        %979 = vmatpush1.msra.mxu0 %v973
        %980 = vmatprep.subr.mxu0 0.0
        %981 = vmatpush1.msra.mxu0 0.0
        %982 = vmatprep.subr.mxu0 0.0
        %983 = vmatpush1.msra.mxu0 0.0
        %984 = vmatprep.subr.mxu0 0.0
        %985 = vmatpush1.msra.mxu0 0.0
        %986 = vmatprep.subr.mxu0 0.0
        %987 = vmatpush1.msra.mxu0 0.0
        %988 = vmatprep.subr.mxu0 0.0
        %989 = vmatpush1.msra.mxu0 0.0
        %990 = vmatprep.subr.mxu0 0.0
        %991 = vmatpush1.msra.mxu0 0.0
        %992 = vmatprep.subr.mxu0 0.0
        %993 = vmatpush1.msra.mxu0 0.0
        %994 = vmatprep.subr.mxu0 0.0
        %995 = vmatpush1.msra.mxu0 0.0
        %996 = vmatprep.subr.mxu0 0.0
        %997 = vmatpush1.msra.mxu0 0.0
        %998 = vmatprep.subr.mxu0 0.0
        %999 = vmatpush1.msra.mxu0 0.0
        %1000 = vmatprep.subr.mxu0 0.0
        %1001 = vmatpush1.msra.mxu0 0.0
        %1002 = vmatprep.subr.mxu0 0.0
        %1003 = vmatpush1.msra.mxu0 0.0
        %1004 = vmatprep.subr.mxu0 0.0
        %1005 = vmatpush1.msra.mxu0 0.0
        %1006 = vmatprep.subr.mxu0 0.0
        %1007 = vmatpush1.msra.mxu0 0.0
        %1008 = vmatprep.subr.mxu0 0.0
        %1009 = vmatpush1.msra.mxu0 0.0
        %1010 = vmatprep.subr.mxu0 0.0
        %1011 = vmatpush1.msra.mxu0 0.0
        %1012 = vmatprep.subr.mxu0 0.0
        %1013 = vmatpush1.msra.mxu0 0.0
        %1014 = vmatprep.subr.mxu0 0.0
        %1015 = vmatpush1.msra.mxu0 0.0
        %1016 = vmatprep.subr.mxu0 0.0
        %1017 = vmatpush1.msra.mxu0 0.0
        %1018 = vmatprep.subr.mxu0 0.0
        %1019 = vmatpush1.msra.mxu0 0.0
        %1020 = vmatprep.subr.mxu0 0.0
        %1021 = vmatpush1.msra.mxu0 0.0
        %1022 = vmatprep.subr.mxu0 0.0
        %1023 = vmatpush1.msra.mxu0 0.0
        %1024 = vmatprep.subr.mxu0 0.0
        %1025 = vmatpush1.msra.mxu0 0.0
        %1026 = vmatprep.subr.mxu0 0.0
        %1027 = vmatpush1.msra.mxu0 0.0
        %1028 = vmatprep.subr.mxu0 0.0
        %1029 = vmatpush1.msra.mxu0 0.0
        %1030 = vmatprep.subr.mxu0 0.0
        %1031 = vmatpush1.msra.mxu0 0.0
        %1032 = vmatprep.subr.mxu0 0.0
        %1033 = vmatpush1.msra.mxu0 0.0
        %1034 = vmatprep.subr.mxu0 0.0
        %1035 = vmatpush1.msra.mxu0 0.0
        %1036 = vmatprep.subr.mxu0 0.0
        %1037 = vmatpush1.msra.mxu0 0.0
        %1038 = vmatprep.subr.mxu0 0.0
        %1039 = vmatpush1.msra.mxu0 0.0
        %1040 = vmatprep.subr.mxu0 0.0
        %1041 = vmatpush1.msra.mxu0 0.0
        %1042 = vmatprep.mubr.f32.mxu0 0.0
        %1043 = vmatmul.mubr.f32.gmra.mrb[0].mxu0 %v976
        %v1044 = vpop.f32.mrb[0].mxu0
        %v1045 = vadd.f32 0.0, %v1044
        %v1046 = vpop.f32.mrb[0].mxu0
        %1047 = vdwg.mxu0
        %1048 = vrot.lane.b32.xlu0 %v389, 64
        %v1049 = vpop.permute.xlu0 %1048
        %1050 = vrot.lane.b32.xlu0 %v317, 64
        %v1051 = vpop.permute.xlu0 %1050
        %v1052 = vsel %vm390, %v1049, 0
        %v1054 = vsel %vm390, %v1051, 0
        %1056 = vmatprep.subr.mxu0 0.0
        %1057 = vmatpush1.xpose.msra.mxu0 %v1054
        %1058 = vmatprep.subr.mxu0 0.0
        %1059 = vmatpush1.xpose.msra.mxu0 0.0
        %1060 = vmatprep.subr.mxu0 0.0
        %1061 = vmatpush1.xpose.msra.mxu0 0.0
        %1062 = vmatprep.subr.mxu0 0.0
        %1063 = vmatpush1.xpose.msra.mxu0 0.0
        %1064 = vmatprep.subr.mxu0 0.0
        %1065 = vmatpush1.xpose.msra.mxu0 0.0
        %1066 = vmatprep.subr.mxu0 0.0
        %1067 = vmatpush1.xpose.msra.mxu0 0.0
        %1068 = vmatprep.subr.mxu0 0.0
        %1069 = vmatpush1.xpose.msra.mxu0 0.0
        %1070 = vmatprep.subr.mxu0 0.0
        %1071 = vmatpush1.xpose.msra.mxu0 0.0
        %1072 = vmatprep.subr.mxu0 0.0
        %1073 = vmatpush1.xpose.msra.mxu0 0.0
        %1074 = vmatprep.subr.mxu0 0.0
        %1075 = vmatpush1.xpose.msra.mxu0 0.0
        %1076 = vmatprep.subr.mxu0 0.0
        %1077 = vmatpush1.xpose.msra.mxu0 0.0
        %1078 = vmatprep.subr.mxu0 0.0
        %1079 = vmatpush1.xpose.msra.mxu0 0.0
        %1080 = vmatprep.subr.mxu0 0.0
        %1081 = vmatpush1.xpose.msra.mxu0 0.0
        %1082 = vmatprep.subr.mxu0 0.0
        %1083 = vmatpush1.xpose.msra.mxu0 0.0
        %1084 = vmatprep.subr.mxu0 0.0
        %1085 = vmatpush1.xpose.msra.mxu0 0.0
        %1086 = vmatprep.subr.mxu0 0.0
        %1087 = vmatpush1.xpose.msra.mxu0 0.0
        %1088 = vmatprep.subr.mxu0 0.0
        %1089 = vmatpush1.xpose.msra.mxu0 0.0
        %1090 = vmatprep.subr.mxu0 0.0
        %1091 = vmatpush1.xpose.msra.mxu0 0.0
        %1092 = vmatprep.subr.mxu0 0.0
        %1093 = vmatpush1.xpose.msra.mxu0 0.0
        %1094 = vmatprep.subr.mxu0 0.0
        %1095 = vmatpush1.xpose.msra.mxu0 0.0
        %1096 = vmatprep.subr.mxu0 0.0
        %1097 = vmatpush1.xpose.msra.mxu0 0.0
        %1098 = vmatprep.subr.mxu0 0.0
        %1099 = vmatpush1.xpose.msra.mxu0 0.0
        %1100 = vmatprep.subr.mxu0 0.0
        %1101 = vmatpush1.xpose.msra.mxu0 0.0
        %1102 = vmatprep.subr.mxu0 0.0
        %1103 = vmatpush1.xpose.msra.mxu0 0.0
        %1104 = vmatprep.subr.mxu0 0.0
        %1105 = vmatpush1.xpose.msra.mxu0 0.0
        %1106 = vmatprep.subr.mxu0 0.0
        %1107 = vmatpush1.xpose.msra.mxu0 0.0
        %1108 = vmatprep.subr.mxu0 0.0
        %1109 = vmatpush1.xpose.msra.mxu0 0.0
        %1110 = vmatprep.subr.mxu0 0.0
        %1111 = vmatpush1.xpose.msra.mxu0 0.0
        %1112 = vmatprep.subr.mxu0 0.0
        %1113 = vmatpush1.xpose.msra.mxu0 0.0
        %1114 = vmatprep.subr.mxu0 0.0
        %1115 = vmatpush1.xpose.msra.mxu0 0.0
        %1116 = vmatprep.subr.mxu0 0.0
        %1117 = vmatpush1.xpose.msra.mxu0 0.0
        %1118 = vmatprep.subr.mxu0 0.0
        %1119 = vmatpush1.xpose.msra.mxu0 0.0
        %1120 = vmatprep.mubr.f32.mxu0 0.0
        %1121 = vmatmul.mubr.f32.gmra.mrb[0].mxu0 %v1052
        %v1122 = vpop.f32.mrb[0].mxu0
        %v1123 = vadd.f32 0.0, %v1122
        %v1124 = vpop.f32.mrb[0].mxu0
        %1125 = vdwg.mxu0
        %v1126 = vsel %vm467, %v1123, -inf
        %1127 = vmax.xlane.f32.xlu0 %v1126
        %v1128 = vpop.xlane.xlu0 %1127
        %v1129 = vsub.f32 %v1123, %v1128
        %v1130 = vmul.f32 %v1129, 1.442695
        %v1131 = vpow.pop %v1130
        %v1132 = vsel %vm467, %v1131, 0.0
        %1133 = vadd.xlane.f32.xlu0 %v1132
        %v1134 = vpop.xlane.xlu0 %1133
        %v1135 = vrcp.pop %v1134
        %v1136 = vmul.f32 %v1131, %v1135
        %1137 = vrot.lane.b32.xlu0 %v386, 64
        %v1138 = vpop.permute.xlu0 %1137
        %v1141 = vsel %vm467, %v1136, 0
        %1143 = vmatprep.subr.mxu0 0.0
        %1144 = vmatpush1.msra.mxu0 %v1138
        %1145 = vmatprep.subr.mxu0 0.0
        %1146 = vmatpush1.msra.mxu0 0.0
        %1147 = vmatprep.subr.mxu0 0.0
        %1148 = vmatpush1.msra.mxu0 0.0
        %1149 = vmatprep.subr.mxu0 0.0
        %1150 = vmatpush1.msra.mxu0 0.0
        %1151 = vmatprep.subr.mxu0 0.0
        %1152 = vmatpush1.msra.mxu0 0.0
        %1153 = vmatprep.subr.mxu0 0.0
        %1154 = vmatpush1.msra.mxu0 0.0
        %1155 = vmatprep.subr.mxu0 0.0
        %1156 = vmatpush1.msra.mxu0 0.0
        %1157 = vmatprep.subr.mxu0 0.0
        %1158 = vmatpush1.msra.mxu0 0.0
        %1159 = vmatprep.subr.mxu0 0.0
        %1160 = vmatpush1.msra.mxu0 0.0
        %1161 = vmatprep.subr.mxu0 0.0
        %1162 = vmatpush1.msra.mxu0 0.0
        %1163 = vmatprep.subr.mxu0 0.0
        %1164 = vmatpush1.msra.mxu0 0.0
        %1165 = vmatprep.subr.mxu0 0.0
        %1166 = vmatpush1.msra.mxu0 0.0
        %1167 = vmatprep.subr.mxu0 0.0
        %1168 = vmatpush1.msra.mxu0 0.0
        %1169 = vmatprep.subr.mxu0 0.0
        %1170 = vmatpush1.msra.mxu0 0.0
        %1171 = vmatprep.subr.mxu0 0.0
        %1172 = vmatpush1.msra.mxu0 0.0
        %1173 = vmatprep.subr.mxu0 0.0
        %1174 = vmatpush1.msra.mxu0 0.0
        %1175 = vmatprep.subr.mxu0 0.0
        %1176 = vmatpush1.msra.mxu0 0.0
        %1177 = vmatprep.subr.mxu0 0.0
        %1178 = vmatpush1.msra.mxu0 0.0
        %1179 = vmatprep.subr.mxu0 0.0
        %1180 = vmatpush1.msra.mxu0 0.0
        %1181 = vmatprep.subr.mxu0 0.0
        %1182 = vmatpush1.msra.mxu0 0.0
        %1183 = vmatprep.subr.mxu0 0.0
        %1184 = vmatpush1.msra.mxu0 0.0
        %1185 = vmatprep.subr.mxu0 0.0
        %1186 = vmatpush1.msra.mxu0 0.0
        %1187 = vmatprep.subr.mxu0 0.0
        %1188 = vmatpush1.msra.mxu0 0.0
        %1189 = vmatprep.subr.mxu0 0.0
        %1190 = vmatpush1.msra.mxu0 0.0
        %1191 = vmatprep.subr.mxu0 0.0
        %1192 = vmatpush1.msra.mxu0 0.0
        %1193 = vmatprep.subr.mxu0 0.0
        %1194 = vmatpush1.msra.mxu0 0.0
        %1195 = vmatprep.subr.mxu0 0.0
        %1196 = vmatpush1.msra.mxu0 0.0
        %1197 = vmatprep.subr.mxu0 0.0
        %1198 = vmatpush1.msra.mxu0 0.0
        %1199 = vmatprep.subr.mxu0 0.0
        %1200 = vmatpush1.msra.mxu0 0.0
        %1201 = vmatprep.subr.mxu0 0.0
        %1202 = vmatpush1.msra.mxu0 0.0
        %1203 = vmatprep.subr.mxu0 0.0
        %1204 = vmatpush1.msra.mxu0 0.0
        %1205 = vmatprep.subr.mxu0 0.0
        %1206 = vmatpush1.msra.mxu0 0.0
        %1207 = vmatprep.mubr.f32.mxu0 0.0
        %1208 = vmatmul.mubr.f32.gmra.mrb[0].mxu0 %v1141
        %v1209 = vpop.f32.mrb[0].mxu0
        %v1210 = vadd.f32 0.0, %v1209
        %v1211 = vpop.f32.mrb[0].mxu0
        %1212 = vdwg.mxu0
        %1213 = vrot.lane.b32.xlu0 %v389, 48
        %v1214 = vpop.permute.xlu0 %1213
        %1215 = vrot.lane.b32.xlu0 %v317, 48
        %v1216 = vpop.permute.xlu0 %1215
        %v1217 = vsel %vm390, %v1214, 0
        %v1219 = vsel %vm390, %v1216, 0
        %1221 = vmatprep.subr.mxu0 0.0
        %1222 = vmatpush1.xpose.msra.mxu0 %v1219
        %1223 = vmatprep.subr.mxu0 0.0
        %1224 = vmatpush1.xpose.msra.mxu0 0.0
        %1225 = vmatprep.subr.mxu0 0.0
        %1226 = vmatpush1.xpose.msra.mxu0 0.0
        %1227 = vmatprep.subr.mxu0 0.0
        %1228 = vmatpush1.xpose.msra.mxu0 0.0
        %1229 = vmatprep.subr.mxu0 0.0
        %1230 = vmatpush1.xpose.msra.mxu0 0.0
        %1231 = vmatprep.subr.mxu0 0.0
        %1232 = vmatpush1.xpose.msra.mxu0 0.0
        %1233 = vmatprep.subr.mxu0 0.0
        %1234 = vmatpush1.xpose.msra.mxu0 0.0
        %1235 = vmatprep.subr.mxu0 0.0
        %1236 = vmatpush1.xpose.msra.mxu0 0.0
        %1237 = vmatprep.subr.mxu0 0.0
        %1238 = vmatpush1.xpose.msra.mxu0 0.0
        %1239 = vmatprep.subr.mxu0 0.0
        %1240 = vmatpush1.xpose.msra.mxu0 0.0
        %1241 = vmatprep.subr.mxu0 0.0
        %1242 = vmatpush1.xpose.msra.mxu0 0.0
        %1243 = vmatprep.subr.mxu0 0.0
        %1244 = vmatpush1.xpose.msra.mxu0 0.0
        %1245 = vmatprep.subr.mxu0 0.0
        %1246 = vmatpush1.xpose.msra.mxu0 0.0
        %1247 = vmatprep.subr.mxu0 0.0
        %1248 = vmatpush1.xpose.msra.mxu0 0.0
        %1249 = vmatprep.subr.mxu0 0.0
        %1250 = vmatpush1.xpose.msra.mxu0 0.0
        %1251 = vmatprep.subr.mxu0 0.0
        %1252 = vmatpush1.xpose.msra.mxu0 0.0
        %1253 = vmatprep.subr.mxu0 0.0
        %1254 = vmatpush1.xpose.msra.mxu0 0.0
        %1255 = vmatprep.subr.mxu0 0.0
        %1256 = vmatpush1.xpose.msra.mxu0 0.0
        %1257 = vmatprep.subr.mxu0 0.0
        %1258 = vmatpush1.xpose.msra.mxu0 0.0
        %1259 = vmatprep.subr.mxu0 0.0
        %1260 = vmatpush1.xpose.msra.mxu0 0.0
        %1261 = vmatprep.subr.mxu0 0.0
        %1262 = vmatpush1.xpose.msra.mxu0 0.0
        %1263 = vmatprep.subr.mxu0 0.0
        %1264 = vmatpush1.xpose.msra.mxu0 0.0
        %1265 = vmatprep.subr.mxu0 0.0
        %1266 = vmatpush1.xpose.msra.mxu0 0.0
        %1267 = vmatprep.subr.mxu0 0.0
        %1268 = vmatpush1.xpose.msra.mxu0 0.0
        %1269 = vmatprep.subr.mxu0 0.0
        %1270 = vmatpush1.xpose.msra.mxu0 0.0
        %1271 = vmatprep.subr.mxu0 0.0
        %1272 = vmatpush1.xpose.msra.mxu0 0.0
        %1273 = vmatprep.subr.mxu0 0.0
        %1274 = vmatpush1.xpose.msra.mxu0 0.0
        %1275 = vmatprep.subr.mxu0 0.0
        %1276 = vmatpush1.xpose.msra.mxu0 0.0
        %1277 = vmatprep.subr.mxu0 0.0
        %1278 = vmatpush1.xpose.msra.mxu0 0.0
        %1279 = vmatprep.subr.mxu0 0.0
        %1280 = vmatpush1.xpose.msra.mxu0 0.0
        %1281 = vmatprep.subr.mxu0 0.0
        %1282 = vmatpush1.xpose.msra.mxu0 0.0
        %1283 = vmatprep.subr.mxu0 0.0
        %1284 = vmatpush1.xpose.msra.mxu0 0.0
        %1285 = vmatprep.mubr.f32.mxu0 0.0
        %1286 = vmatmul.mubr.f32.gmra.mrb[0].mxu0 %v1217
        %v1287 = vpop.f32.mrb[0].mxu0
        %v1288 = vadd.f32 0.0, %v1287
        %v1289 = vpop.f32.mrb[0].mxu0
        %1290 = vdwg.mxu0
        %v1291 = vsel %vm467, %v1288, -inf
        %1292 = vmax.xlane.f32.xlu0 %v1291
        %v1293 = vpop.xlane.xlu0 %1292
        %v1294 = vsub.f32 %v1288, %v1293
        %v1295 = vmul.f32 %v1294, 1.442695
        %v1296 = vpow.pop %v1295
        %v1297 = vsel %vm467, %v1296, 0.0
        %1298 = vadd.xlane.f32.xlu0 %v1297
        %v1299 = vpop.xlane.xlu0 %1298
        %v1300 = vrcp.pop %v1299
        %v1301 = vmul.f32 %v1296, %v1300
        %1302 = vrot.lane.b32.xlu0 %v386, 48
        %v1303 = vpop.permute.xlu0 %1302
        %v1306 = vsel %vm467, %v1301, 0
        %1308 = vmatprep.subr.mxu0 0.0
        %1309 = vmatpush1.msra.mxu0 %v1303
        %1310 = vmatprep.subr.mxu0 0.0
        %1311 = vmatpush1.msra.mxu0 0.0
        %1312 = vmatprep.subr.mxu0 0.0
        %1313 = vmatpush1.msra.mxu0 0.0
        %1314 = vmatprep.subr.mxu0 0.0
        %1315 = vmatpush1.msra.mxu0 0.0
        %1316 = vmatprep.subr.mxu0 0.0
        %1317 = vmatpush1.msra.mxu0 0.0
        %1318 = vmatprep.subr.mxu0 0.0
        %1319 = vmatpush1.msra.mxu0 0.0
        %1320 = vmatprep.subr.mxu0 0.0
        %1321 = vmatpush1.msra.mxu0 0.0
        %1322 = vmatprep.subr.mxu0 0.0
        %1323 = vmatpush1.msra.mxu0 0.0
        %1324 = vmatprep.subr.mxu0 0.0
        %1325 = vmatpush1.msra.mxu0 0.0
        %1326 = vmatprep.subr.mxu0 0.0
        %1327 = vmatpush1.msra.mxu0 0.0
        %1328 = vmatprep.subr.mxu0 0.0
        %1329 = vmatpush1.msra.mxu0 0.0
        %1330 = vmatprep.subr.mxu0 0.0
        %1331 = vmatpush1.msra.mxu0 0.0
        %1332 = vmatprep.subr.mxu0 0.0
        %1333 = vmatpush1.msra.mxu0 0.0
        %1334 = vmatprep.subr.mxu0 0.0
        %1335 = vmatpush1.msra.mxu0 0.0
        %1336 = vmatprep.subr.mxu0 0.0
        %1337 = vmatpush1.msra.mxu0 0.0
        %1338 = vmatprep.subr.mxu0 0.0
        %1339 = vmatpush1.msra.mxu0 0.0
        %1340 = vmatprep.subr.mxu0 0.0
        %1341 = vmatpush1.msra.mxu0 0.0
        %1342 = vmatprep.subr.mxu0 0.0
        %1343 = vmatpush1.msra.mxu0 0.0
        %1344 = vmatprep.subr.mxu0 0.0
        %1345 = vmatpush1.msra.mxu0 0.0
        %1346 = vmatprep.subr.mxu0 0.0
        %1347 = vmatpush1.msra.mxu0 0.0
        %1348 = vmatprep.subr.mxu0 0.0
        %1349 = vmatpush1.msra.mxu0 0.0
        %1350 = vmatprep.subr.mxu0 0.0
        %1351 = vmatpush1.msra.mxu0 0.0
        %1352 = vmatprep.subr.mxu0 0.0
        %1353 = vmatpush1.msra.mxu0 0.0
        %1354 = vmatprep.subr.mxu0 0.0
        %1355 = vmatpush1.msra.mxu0 0.0
        %1356 = vmatprep.subr.mxu0 0.0
        %1357 = vmatpush1.msra.mxu0 0.0
        %1358 = vmatprep.subr.mxu0 0.0
        %1359 = vmatpush1.msra.mxu0 0.0
        %1360 = vmatprep.subr.mxu0 0.0
        %1361 = vmatpush1.msra.mxu0 0.0
        %1362 = vmatprep.subr.mxu0 0.0
        %1363 = vmatpush1.msra.mxu0 0.0
        %1364 = vmatprep.subr.mxu0 0.0
        %1365 = vmatpush1.msra.mxu0 0.0
        %1366 = vmatprep.subr.mxu0 0.0
        %1367 = vmatpush1.msra.mxu0 0.0
        %1368 = vmatprep.subr.mxu0 0.0
        %1369 = vmatpush1.msra.mxu0 0.0
        %1370 = vmatprep.subr.mxu0 0.0
        %1371 = vmatpush1.msra.mxu0 0.0
        %1372 = vmatprep.mubr.f32.mxu0 0.0
        %1373 = vmatmul.mubr.f32.gmra.mrb[0].mxu0 %v1306
        %v1374 = vpop.f32.mrb[0].mxu0
        %v1375 = vadd.f32 0.0, %v1374
        %v1376 = vpop.f32.mrb[0].mxu0
        %1377 = vdwg.mxu0
        %1378 = vrot.lane.b32.xlu0 %v389, 32
        %v1379 = vpop.permute.xlu0 %1378
        %1380 = vrot.lane.b32.xlu0 %v317, 32
        %v1381 = vpop.permute.xlu0 %1380
        %v1382 = vsel %vm390, %v1379, 0
        %v1384 = vsel %vm390, %v1381, 0
        %1386 = vmatprep.subr.mxu0 0.0
        %1387 = vmatpush1.xpose.msra.mxu0 %v1384
        %1388 = vmatprep.subr.mxu0 0.0
        %1389 = vmatpush1.xpose.msra.mxu0 0.0
        %1390 = vmatprep.subr.mxu0 0.0
        %1391 = vmatpush1.xpose.msra.mxu0 0.0
        %1392 = vmatprep.subr.mxu0 0.0
        %1393 = vmatpush1.xpose.msra.mxu0 0.0
        %1394 = vmatprep.subr.mxu0 0.0
        %1395 = vmatpush1.xpose.msra.mxu0 0.0
        %1396 = vmatprep.subr.mxu0 0.0
        %1397 = vmatpush1.xpose.msra.mxu0 0.0
        %1398 = vmatprep.subr.mxu0 0.0
        %1399 = vmatpush1.xpose.msra.mxu0 0.0
        %1400 = vmatprep.subr.mxu0 0.0
        %1401 = vmatpush1.xpose.msra.mxu0 0.0
        %1402 = vmatprep.subr.mxu0 0.0
        %1403 = vmatpush1.xpose.msra.mxu0 0.0
        %1404 = vmatprep.subr.mxu0 0.0
        %1405 = vmatpush1.xpose.msra.mxu0 0.0
        %1406 = vmatprep.subr.mxu0 0.0
        %1407 = vmatpush1.xpose.msra.mxu0 0.0
        %1408 = vmatprep.subr.mxu0 0.0
        %1409 = vmatpush1.xpose.msra.mxu0 0.0
        %1410 = vmatprep.subr.mxu0 0.0
        %1411 = vmatpush1.xpose.msra.mxu0 0.0
        %1412 = vmatprep.subr.mxu0 0.0
        %1413 = vmatpush1.xpose.msra.mxu0 0.0
        %1414 = vmatprep.subr.mxu0 0.0
        %1415 = vmatpush1.xpose.msra.mxu0 0.0
        %1416 = vmatprep.subr.mxu0 0.0
        %1417 = vmatpush1.xpose.msra.mxu0 0.0
        %1418 = vmatprep.subr.mxu0 0.0
        %1419 = vmatpush1.xpose.msra.mxu0 0.0
        %1420 = vmatprep.subr.mxu0 0.0
        %1421 = vmatpush1.xpose.msra.mxu0 0.0
        %1422 = vmatprep.subr.mxu0 0.0
        %1423 = vmatpush1.xpose.msra.mxu0 0.0
        %1424 = vmatprep.subr.mxu0 0.0
        %1425 = vmatpush1.xpose.msra.mxu0 0.0
        %1426 = vmatprep.subr.mxu0 0.0
        %1427 = vmatpush1.xpose.msra.mxu0 0.0
        %1428 = vmatprep.subr.mxu0 0.0
        %1429 = vmatpush1.xpose.msra.mxu0 0.0
        %1430 = vmatprep.subr.mxu0 0.0
        %1431 = vmatpush1.xpose.msra.mxu0 0.0
        %1432 = vmatprep.subr.mxu0 0.0
        %1433 = vmatpush1.xpose.msra.mxu0 0.0
        %1434 = vmatprep.subr.mxu0 0.0
        %1435 = vmatpush1.xpose.msra.mxu0 0.0
        %1436 = vmatprep.subr.mxu0 0.0
        %1437 = vmatpush1.xpose.msra.mxu0 0.0
        %1438 = vmatprep.subr.mxu0 0.0
        %1439 = vmatpush1.xpose.msra.mxu0 0.0
        %1440 = vmatprep.subr.mxu0 0.0
        %1441 = vmatpush1.xpose.msra.mxu0 0.0
        %1442 = vmatprep.subr.mxu0 0.0
        %1443 = vmatpush1.xpose.msra.mxu0 0.0
        %1444 = vmatprep.subr.mxu0 0.0
        %1445 = vmatpush1.xpose.msra.mxu0 0.0
        %1446 = vmatprep.subr.mxu0 0.0
        %1447 = vmatpush1.xpose.msra.mxu0 0.0
        %1448 = vmatprep.subr.mxu0 0.0
        %1449 = vmatpush1.xpose.msra.mxu0 0.0
        %1450 = vmatprep.mubr.f32.mxu0 0.0
        %1451 = vmatmul.mubr.f32.gmra.mrb[0].mxu0 %v1382
        %v1452 = vpop.f32.mrb[0].mxu0
        %v1453 = vadd.f32 0.0, %v1452
        %v1454 = vpop.f32.mrb[0].mxu0
        %1455 = vdwg.mxu0
        %v1456 = vsel %vm467, %v1453, -inf
        %1457 = vmax.xlane.f32.xlu0 %v1456
        %v1458 = vpop.xlane.xlu0 %1457
        %v1459 = vsub.f32 %v1453, %v1458
        %v1460 = vmul.f32 %v1459, 1.442695
        %v1461 = vpow.pop %v1460
        %v1462 = vsel %vm467, %v1461, 0.0
        %1463 = vadd.xlane.f32.xlu0 %v1462
        %v1464 = vpop.xlane.xlu0 %1463
        %v1465 = vrcp.pop %v1464
        %v1466 = vmul.f32 %v1461, %v1465
        %1467 = vrot.lane.b32.xlu0 %v386, 32
        %v1468 = vpop.permute.xlu0 %1467
        %v1471 = vsel %vm467, %v1466, 0
        %1473 = vmatprep.subr.mxu0 0.0
        %1474 = vmatpush1.msra.mxu0 %v1468
        %1475 = vmatprep.subr.mxu0 0.0
        %1476 = vmatpush1.msra.mxu0 0.0
        %1477 = vmatprep.subr.mxu0 0.0
        %1478 = vmatpush1.msra.mxu0 0.0
        %1479 = vmatprep.subr.mxu0 0.0
        %1480 = vmatpush1.msra.mxu0 0.0
        %1481 = vmatprep.subr.mxu0 0.0
        %1482 = vmatpush1.msra.mxu0 0.0
        %1483 = vmatprep.subr.mxu0 0.0
        %1484 = vmatpush1.msra.mxu0 0.0
        %1485 = vmatprep.subr.mxu0 0.0
        %1486 = vmatpush1.msra.mxu0 0.0
        %1487 = vmatprep.subr.mxu0 0.0
        %1488 = vmatpush1.msra.mxu0 0.0
        %1489 = vmatprep.subr.mxu0 0.0
        %1490 = vmatpush1.msra.mxu0 0.0
        %1491 = vmatprep.subr.mxu0 0.0
        %1492 = vmatpush1.msra.mxu0 0.0
        %1493 = vmatprep.subr.mxu0 0.0
        %1494 = vmatpush1.msra.mxu0 0.0
        %1495 = vmatprep.subr.mxu0 0.0
        %1496 = vmatpush1.msra.mxu0 0.0
        %1497 = vmatprep.subr.mxu0 0.0
        %1498 = vmatpush1.msra.mxu0 0.0
        %1499 = vmatprep.subr.mxu0 0.0
        %1500 = vmatpush1.msra.mxu0 0.0
        %1501 = vmatprep.subr.mxu0 0.0
        %1502 = vmatpush1.msra.mxu0 0.0
        %1503 = vmatprep.subr.mxu0 0.0
        %1504 = vmatpush1.msra.mxu0 0.0
        %1505 = vmatprep.subr.mxu0 0.0
        %1506 = vmatpush1.msra.mxu0 0.0
        %1507 = vmatprep.subr.mxu0 0.0
        %1508 = vmatpush1.msra.mxu0 0.0
        %1509 = vmatprep.subr.mxu0 0.0
        %1510 = vmatpush1.msra.mxu0 0.0
        %1511 = vmatprep.subr.mxu0 0.0
        %1512 = vmatpush1.msra.mxu0 0.0
        %1513 = vmatprep.subr.mxu0 0.0
        %1514 = vmatpush1.msra.mxu0 0.0
        %1515 = vmatprep.subr.mxu0 0.0
        %1516 = vmatpush1.msra.mxu0 0.0
        %1517 = vmatprep.subr.mxu0 0.0
        %1518 = vmatpush1.msra.mxu0 0.0
        %1519 = vmatprep.subr.mxu0 0.0
        %1520 = vmatpush1.msra.mxu0 0.0
        %1521 = vmatprep.subr.mxu0 0.0
        %1522 = vmatpush1.msra.mxu0 0.0
        %1523 = vmatprep.subr.mxu0 0.0
        %1524 = vmatpush1.msra.mxu0 0.0
        %1525 = vmatprep.subr.mxu0 0.0
        %1526 = vmatpush1.msra.mxu0 0.0
        %1527 = vmatprep.subr.mxu0 0.0
        %1528 = vmatpush1.msra.mxu0 0.0
        %1529 = vmatprep.subr.mxu0 0.0
        %1530 = vmatpush1.msra.mxu0 0.0
        %1531 = vmatprep.subr.mxu0 0.0
        %1532 = vmatpush1.msra.mxu0 0.0
        %1533 = vmatprep.subr.mxu0 0.0
        %1534 = vmatpush1.msra.mxu0 0.0
        %1535 = vmatprep.subr.mxu0 0.0
        %1536 = vmatpush1.msra.mxu0 0.0
        %1537 = vmatprep.mubr.f32.mxu0 0.0
        %1538 = vmatmul.mubr.f32.gmra.mrb[0].mxu0 %v1471
        %v1539 = vpop.f32.mrb[0].mxu0
        %v1540 = vadd.f32 0.0, %v1539
        %v1541 = vpop.f32.mrb[0].mxu0
        %1542 = vdwg.mxu0
        %1543 = vrot.lane.b32.xlu0 %v389, 16
        %v1544 = vpop.permute.xlu0 %1543
        %1545 = vrot.lane.b32.xlu0 %v317, 16
        %v1546 = vpop.permute.xlu0 %1545
        %v1547 = vsel %vm390, %v1544, 0
        %v1549 = vsel %vm390, %v1546, 0
        %1551 = vmatprep.subr.mxu0 0.0
        %1552 = vmatpush1.xpose.msra.mxu0 %v1549
        %1553 = vmatprep.subr.mxu0 0.0
        %1554 = vmatpush1.xpose.msra.mxu0 0.0
        %1555 = vmatprep.subr.mxu0 0.0
        %1556 = vmatpush1.xpose.msra.mxu0 0.0
        %1557 = vmatprep.subr.mxu0 0.0
        %1558 = vmatpush1.xpose.msra.mxu0 0.0
        %1559 = vmatprep.subr.mxu0 0.0
        %1560 = vmatpush1.xpose.msra.mxu0 0.0
        %1561 = vmatprep.subr.mxu0 0.0
        %1562 = vmatpush1.xpose.msra.mxu0 0.0
        %1563 = vmatprep.subr.mxu0 0.0
        %1564 = vmatpush1.xpose.msra.mxu0 0.0
        %1565 = vmatprep.subr.mxu0 0.0
        %1566 = vmatpush1.xpose.msra.mxu0 0.0
        %1567 = vmatprep.subr.mxu0 0.0
        %1568 = vmatpush1.xpose.msra.mxu0 0.0
        %1569 = vmatprep.subr.mxu0 0.0
        %1570 = vmatpush1.xpose.msra.mxu0 0.0
        %1571 = vmatprep.subr.mxu0 0.0
        %1572 = vmatpush1.xpose.msra.mxu0 0.0
        %1573 = vmatprep.subr.mxu0 0.0
        %1574 = vmatpush1.xpose.msra.mxu0 0.0
        %1575 = vmatprep.subr.mxu0 0.0
        %1576 = vmatpush1.xpose.msra.mxu0 0.0
        %1577 = vmatprep.subr.mxu0 0.0
        %1578 = vmatpush1.xpose.msra.mxu0 0.0
        %1579 = vmatprep.subr.mxu0 0.0
        %1580 = vmatpush1.xpose.msra.mxu0 0.0
        %1581 = vmatprep.subr.mxu0 0.0
        %1582 = vmatpush1.xpose.msra.mxu0 0.0
        %1583 = vmatprep.subr.mxu0 0.0
        %1584 = vmatpush1.xpose.msra.mxu0 0.0
        %1585 = vmatprep.subr.mxu0 0.0
        %1586 = vmatpush1.xpose.msra.mxu0 0.0
        %1587 = vmatprep.subr.mxu0 0.0
        %1588 = vmatpush1.xpose.msra.mxu0 0.0
        %1589 = vmatprep.subr.mxu0 0.0
        %1590 = vmatpush1.xpose.msra.mxu0 0.0
        %1591 = vmatprep.subr.mxu0 0.0
        %1592 = vmatpush1.xpose.msra.mxu0 0.0
        %1593 = vmatprep.subr.mxu0 0.0
        %1594 = vmatpush1.xpose.msra.mxu0 0.0
        %1595 = vmatprep.subr.mxu0 0.0
        %1596 = vmatpush1.xpose.msra.mxu0 0.0
        %1597 = vmatprep.subr.mxu0 0.0
        %1598 = vmatpush1.xpose.msra.mxu0 0.0
        %1599 = vmatprep.subr.mxu0 0.0
        %1600 = vmatpush1.xpose.msra.mxu0 0.0
        %1601 = vmatprep.subr.mxu0 0.0
        %1602 = vmatpush1.xpose.msra.mxu0 0.0
        %1603 = vmatprep.subr.mxu0 0.0
        %1604 = vmatpush1.xpose.msra.mxu0 0.0
        %1605 = vmatprep.subr.mxu0 0.0
        %1606 = vmatpush1.xpose.msra.mxu0 0.0
        %1607 = vmatprep.subr.mxu0 0.0
        %1608 = vmatpush1.xpose.msra.mxu0 0.0
        %1609 = vmatprep.subr.mxu0 0.0
        %1610 = vmatpush1.xpose.msra.mxu0 0.0
        %1611 = vmatprep.subr.mxu0 0.0
        %1612 = vmatpush1.xpose.msra.mxu0 0.0
        %1613 = vmatprep.subr.mxu0 0.0
        %1614 = vmatpush1.xpose.msra.mxu0 0.0
        %1615 = vmatprep.mubr.f32.mxu0 0.0
        %1616 = vmatmul.mubr.f32.gmra.mrb[0].mxu0 %v1547
        %v1617 = vpop.f32.mrb[0].mxu0
        %v1618 = vadd.f32 0.0, %v1617
        %v1619 = vpop.f32.mrb[0].mxu0
        %1620 = vdwg.mxu0
        %v1621 = vsel %vm467, %v1618, -inf
        %1622 = vmax.xlane.f32.xlu0 %v1621
        %v1623 = vpop.xlane.xlu0 %1622
        %v1624 = vsub.f32 %v1618, %v1623
        %v1625 = vmul.f32 %v1624, 1.442695
        %v1626 = vpow.pop %v1625
        %v1627 = vsel %vm467, %v1626, 0.0
        %1628 = vadd.xlane.f32.xlu0 %v1627
        %v1629 = vpop.xlane.xlu0 %1628
        %v1630 = vrcp.pop %v1629
        %v1631 = vmul.f32 %v1626, %v1630
        %1632 = vrot.lane.b32.xlu0 %v386, 16
        %v1633 = vpop.permute.xlu0 %1632
        %v1636 = vsel %vm467, %v1631, 0
        %1638 = vmatprep.subr.mxu0 0.0
        %1639 = vmatpush1.msra.mxu0 %v1633
        %1640 = vmatprep.subr.mxu0 0.0
        %1641 = vmatpush1.msra.mxu0 0.0
        %1642 = vmatprep.subr.mxu0 0.0
        %1643 = vmatpush1.msra.mxu0 0.0
        %1644 = vmatprep.subr.mxu0 0.0
        %1645 = vmatpush1.msra.mxu0 0.0
        %1646 = vmatprep.subr.mxu0 0.0
        %1647 = vmatpush1.msra.mxu0 0.0
        %1648 = vmatprep.subr.mxu0 0.0
        %1649 = vmatpush1.msra.mxu0 0.0
        %1650 = vmatprep.subr.mxu0 0.0
        %1651 = vmatpush1.msra.mxu0 0.0
        %1652 = vmatprep.subr.mxu0 0.0
        %1653 = vmatpush1.msra.mxu0 0.0
        %1654 = vmatprep.subr.mxu0 0.0
        %1655 = vmatpush1.msra.mxu0 0.0
        %1656 = vmatprep.subr.mxu0 0.0
        %1657 = vmatpush1.msra.mxu0 0.0
        %1658 = vmatprep.subr.mxu0 0.0
        %1659 = vmatpush1.msra.mxu0 0.0
        %1660 = vmatprep.subr.mxu0 0.0
        %1661 = vmatpush1.msra.mxu0 0.0
        %1662 = vmatprep.subr.mxu0 0.0
        %1663 = vmatpush1.msra.mxu0 0.0
        %1664 = vmatprep.subr.mxu0 0.0
        %1665 = vmatpush1.msra.mxu0 0.0
        %1666 = vmatprep.subr.mxu0 0.0
        %1667 = vmatpush1.msra.mxu0 0.0
        %1668 = vmatprep.subr.mxu0 0.0
        %1669 = vmatpush1.msra.mxu0 0.0
        %1670 = vmatprep.subr.mxu0 0.0
        %1671 = vmatpush1.msra.mxu0 0.0
        %1672 = vmatprep.subr.mxu0 0.0
        %1673 = vmatpush1.msra.mxu0 0.0
        %1674 = vmatprep.subr.mxu0 0.0
        %1675 = vmatpush1.msra.mxu0 0.0
        %1676 = vmatprep.subr.mxu0 0.0
        %1677 = vmatpush1.msra.mxu0 0.0
        %1678 = vmatprep.subr.mxu0 0.0
        %1679 = vmatpush1.msra.mxu0 0.0
        %1680 = vmatprep.subr.mxu0 0.0
        %1681 = vmatpush1.msra.mxu0 0.0
        %1682 = vmatprep.subr.mxu0 0.0
        %1683 = vmatpush1.msra.mxu0 0.0
        %1684 = vmatprep.subr.mxu0 0.0
        %1685 = vmatpush1.msra.mxu0 0.0
        %1686 = vmatprep.subr.mxu0 0.0
        %1687 = vmatpush1.msra.mxu0 0.0
        %1688 = vmatprep.subr.mxu0 0.0
        %1689 = vmatpush1.msra.mxu0 0.0
        %1690 = vmatprep.subr.mxu0 0.0
        %1691 = vmatpush1.msra.mxu0 0.0
        %1692 = vmatprep.subr.mxu0 0.0
        %1693 = vmatpush1.msra.mxu0 0.0
        %1694 = vmatprep.subr.mxu0 0.0
        %1695 = vmatpush1.msra.mxu0 0.0
        %1696 = vmatprep.subr.mxu0 0.0
        %1697 = vmatpush1.msra.mxu0 0.0
        %1698 = vmatprep.subr.mxu0 0.0
        %1699 = vmatpush1.msra.mxu0 0.0
        %1700 = vmatprep.subr.mxu0 0.0
        %1701 = vmatpush1.msra.mxu0 0.0
        %1702 = vmatprep.mubr.f32.mxu0 0.0
        %1703 = vmatmul.mubr.f32.gmra.mrb[0].mxu0 %v1636
        %v1704 = vpop.f32.mrb[0].mxu0
        %v1705 = vadd.f32 0.0, %v1704
        %v1706 = vpop.f32.mrb[0].mxu0
        %1707 = vdwg.mxu0
        %1708 = vrot.lane.b32.xlu0 %v640, 8
        %v1709 = vpop.permute.xlu0 %1708
        %1711 = vrot.lane.b32.xlu0 %v806, 16
        %v1712 = vpop.permute.xlu0 %1711
        %1714 = vrot.lane.b32.xlu0 %v971, 24
        %v1715 = vpop.permute.xlu0 %1714
        %1717 = vrot.lane.b32.xlu0 %v1136, 32
        %v1718 = vpop.permute.xlu0 %1717
        %1720 = vrot.lane.b32.xlu0 %v1301, 40
        %v1721 = vpop.permute.xlu0 %1720
        %1723 = vrot.lane.b32.xlu0 %v1466, 48
        %v1724 = vpop.permute.xlu0 %1723
        %1726 = vrot.lane.b32.xlu0 %v1631, 56
        %v1727 = vpop.permute.xlu0 %1726
        %v1729 = vsel %vm467, %v478, %v1709
        %v1730 = vsel %vm390, %v1729, %v1712
        %vm1731 = vcmask 195584
        %v1732 = vsel %vm1731, %v1730, %v1715
        %v1733 = vsel %vm244, %v1732, %v1718
        %vm1734 = vcmask 326656
        %v1735 = vsel %vm1734, %v1733, %v1721
        %vm1736 = vcmask 392192
        %v1737 = vsel %vm1736, %v1735, %v1724
        %vm1738 = vcmask 457728
        %v1739 = vsel %vm1738, %v1737, %v1727
        %vm1740 = vcmask 523264
        %1741 = vst.msk [vmem:[%s230] sm:$0xff] %vm1740, %v1739
        %1743 = vrot.lane.b32.xlu0 %v715, 16
        %v1744 = vpop.permute.xlu0 %1743
        %1747 = vrot.lane.b32.xlu0 %v880, 32
        %v1748 = vpop.permute.xlu0 %1747
        %1751 = vrot.lane.b32.xlu0 %v1045, 48
        %v1752 = vpop.permute.xlu0 %1751
        %1755 = vrot.lane.b32.xlu0 %v1210, 64
        %v1756 = vpop.permute.xlu0 %1755
        %1759 = vrot.lane.b32.xlu0 %v1375, 80
        %v1760 = vpop.permute.xlu0 %1759
        %1763 = vrot.lane.b32.xlu0 %v1540, 96
        %v1764 = vpop.permute.xlu0 %1763
        %1767 = vrot.lane.b32.xlu0 %v1705, 112
        %v1768 = vpop.permute.xlu0 %1767
        %v1770 = vsel %vm390, %v549, %v1744
        %v1771 = vsel %vm244, %v1770, %v1748
        %v1772 = vsel %vm1736, %v1771, %v1752
        %v1773 = vsel %vm1740, %v1772, %v1756
        %vm1774 = vcmask 654336
        %v1775 = vsel %vm1774, %v1773, %v1760
        %vm1776 = vcmask 785408
        %v1777 = vsel %vm1776, %v1775, %v1764
        %vm1778 = vcmask 916480
        %v1779 = vsel %vm1778, %v1777, %v1768
        %v1780 = vld [vmem:[%s2] sm:$0xff]
        %v1781 = vld [vmem:[%s2 + $0x8] sm:$0xff]
        %v1782 = vld [vmem:[%s2 + $0x10] sm:$0xff]
        %v1783 = vld [vmem:[%s2 + $0x18] sm:$0xff]
        %v1784 = vld [vmem:[%s2 + $0x20] sm:$0xff]
        %v1785 = vld [vmem:[%s2 + $0x28] sm:$0xff]
        %v1786 = vld [vmem:[%s2 + $0x30] sm:$0xff]
        %v1787 = vld [vmem:[%s2 + $0x38] sm:$0xff]
        %v1788 = vld [vmem:[%s2 + $0x40] sm:$0xff]
        %v1789 = vld [vmem:[%s2 + $0x48] sm:$0xff]
        %v1790 = vld [vmem:[%s2 + $0x50] sm:$0xff]
        %v1791 = vld [vmem:[%s2 + $0x58] sm:$0xff]
        %v1792 = vld [vmem:[%s2 + $0x60] sm:$0xff]
        %v1793 = vld [vmem:[%s2 + $0x68] sm:$0xff]
        %v1794 = vld [vmem:[%s2 + $0x70] sm:$0xff]
        %v1795 = vld [vmem:[%s2 + $0x78] sm:$0xff]
        %v1796 = vld [vmem:[%s3] sm:$0x1]
        %v1798 = vlaneseq
        %v1799 = vshrl.u32 %v1798, 7
        %v1800 = vsub.s32 0, %v1799
        %v1801 = vrot.slane %v1796, %v1800
        %1803 = vmatprep.subr.mxu0 0.0
        %1804 = vmatpush1.msra.mxu0 %v1780
        %1805 = vmatprep.subr.mxu0 0.0
        %1806 = vmatpush1.msra.mxu0 %v1781
        %1807 = vmatprep.subr.mxu0 0.0
        %1808 = vmatpush1.msra.mxu0 %v1782
        %1809 = vmatprep.subr.mxu0 0.0
        %1810 = vmatpush1.msra.mxu0 %v1783
        %1811 = vmatprep.subr.mxu0 0.0
        %1812 = vmatpush1.msra.mxu0 %v1784
        %1813 = vmatprep.subr.mxu0 0.0
        %1814 = vmatpush1.msra.mxu0 %v1785
        %1815 = vmatprep.subr.mxu0 0.0
        %1816 = vmatpush1.msra.mxu0 %v1786
        %1817 = vmatprep.subr.mxu0 0.0
        %1818 = vmatpush1.msra.mxu0 %v1787
        %1819 = vmatprep.subr.mxu0 0.0
        %1820 = vmatpush1.msra.mxu0 %v1788
        %1821 = vmatprep.subr.mxu0 0.0
        %1822 = vmatpush1.msra.mxu0 %v1789
        %1823 = vmatprep.subr.mxu0 0.0
        %1824 = vmatpush1.msra.mxu0 %v1790
        %1825 = vmatprep.subr.mxu0 0.0
        %1826 = vmatpush1.msra.mxu0 %v1791
        %1827 = vmatprep.subr.mxu0 0.0
        %1828 = vmatpush1.msra.mxu0 %v1792
        %1829 = vmatprep.subr.mxu0 0.0
        %1830 = vmatpush1.msra.mxu0 %v1793
        %1831 = vmatprep.subr.mxu0 0.0
        %1832 = vmatpush1.msra.mxu0 %v1794
        %1833 = vmatprep.subr.mxu0 0.0
        %1834 = vmatpush1.msra.mxu0 %v1795
        %1835 = vmatprep.subr.mxu0 0.0
        %1836 = vmatpush1.msra.mxu0 0.0
        %1837 = vmatprep.subr.mxu0 0.0
        %1838 = vmatpush1.msra.mxu0 0.0
        %1839 = vmatprep.subr.mxu0 0.0
        %1840 = vmatpush1.msra.mxu0 0.0
        %1841 = vmatprep.subr.mxu0 0.0
        %1842 = vmatpush1.msra.mxu0 0.0
        %1843 = vmatprep.subr.mxu0 0.0
        %1844 = vmatpush1.msra.mxu0 0.0
        %1845 = vmatprep.subr.mxu0 0.0
        %1846 = vmatpush1.msra.mxu0 0.0
        %1847 = vmatprep.subr.mxu0 0.0
        %1848 = vmatpush1.msra.mxu0 0.0
        %1849 = vmatprep.subr.mxu0 0.0
        %1850 = vmatpush1.msra.mxu0 0.0
        %1851 = vmatprep.subr.mxu0 0.0
        %1852 = vmatpush1.msra.mxu0 0.0
        %1853 = vmatprep.subr.mxu0 0.0
        %1854 = vmatpush1.msra.mxu0 0.0
        %1855 = vmatprep.subr.mxu0 0.0
        %1856 = vmatpush1.msra.mxu0 0.0
        %1857 = vmatprep.subr.mxu0 0.0
        %1858 = vmatpush1.msra.mxu0 0.0
        %1859 = vmatprep.subr.mxu0 0.0
        %1860 = vmatpush1.msra.mxu0 0.0
        %1861 = vmatprep.subr.mxu0 0.0
        %1862 = vmatpush1.msra.mxu0 0.0
        %1863 = vmatprep.subr.mxu0 0.0
        %1864 = vmatpush1.msra.mxu0 0.0
        %1865 = vmatprep.subr.mxu0 0.0
        %1866 = vmatpush1.msra.mxu0 0.0
        %1867 = vmatprep.mubr.f32.mxu0 0.0
        %1868 = vmatmul.mubr.f32.gmra.mrb[0].mxu0 %v1779
        %v1869 = vpop.f32.mrb[0].mxu0
        %v1870 = vadd.f32 %v1801, %v1869
        %v1871 = vpop.f32.mrb[0].mxu0
        %1872 = vdwg.mxu0
        %1873 = vst.msk [vmem:[%s216] sm:$0xff] %vm244, %v1870
        %s1874 = sand.u32 %s117, 1
        %s1875 = scalar_lea.sflag [#allocation3], %s1874
        %s1876 = sand.u32 %s117, 1
        %s1877 = smul.addr %s1876, 8
        %s1878 = scalar_lea.vmem [#allocation2], %s1877
        %p1879 = scmp.lt.s32.totalorder %s20, 1
        %s1880 = scalar_select %p1879, %s20, 1
        %s1881 = smul.addr %s1880, 8
        %s1882 = scalar_lea.vmem %s5, %s1881
        // Predicated region
        $region37: #{cat_attention.1} parent=35 // pred_check
          %p1883 = pneg %p127
        $region38: #{cat_attention.1} parent=35 // pred_check_branch
          %1885 = sbr.rel (%p1883) target = $region40
        $region39: #{cat_attention.1} parent=35 // pred_region
          %s1887 = ssub.s32 128, 128
          %1888 = vsyncadd %s1875, %s1887
          %s1889 = smul.addr %s20, 128
          %s1890 = scalar_lea.hbm %s4, %s1889
          %s1892 = sshll.u32 %s1878, 4
          %s1893 = int_to_ptr.vmem [resolvable:$true] %s1892
          %1895 = dma.vmem_to_hbm [thread:$0]  %s1893, 128, %s1890, %s1875
        $region40: #{cat_attention.1} parent=35 // pred_fallthru
          _
        // Predicated region
        $region41: #{cat_attention.1} parent=35 // pred_check
          %p1896 = pneg %p153
        $region42: #{cat_attention.1} parent=35 // pred_check_branch
          %1898 = sbr.rel (%p1896) target = $region44
        $region43: #{cat_attention.1} parent=35 // pred_region
          _
        $region44: #{cat_attention.1} parent=35 // pred_fallthru
          _
      $region36: #{cat_attention.1} parent=5 // pred_fallthru
        _
      %p1899 = scmp.le.s32.totalorder 2, %s15
      // Predicated region
      $region45: #{cat_attention.1} parent=5 // pred_check
        %p1900 = pneg %p1899
      $region46: #{cat_attention.1} parent=5 // pred_check_branch
        %1902 = sbr.rel (%p1900) target = $region48
      $region47: #{cat_attention.1} parent=5 // pred_region
        %s1903 = ssub.s32 %s15, 2
        // Predicated region
        $region49: #{cat_attention.1} parent=47 // pred_check
          %p1904 = pneg %p133
        $region50: #{cat_attention.1} parent=47 // pred_check_branch
          %1906 = sbr.rel (%p1904) target = $region52
        $region51: #{cat_attention.1} parent=47 // pred_region
          %s1907 = sand.u32 %s118, 1
          %s1908 = scalar_lea.sflag [#allocation3], %s1907
          %s1909 = sand.u32 %s118, 1
          %s1910 = smul.addr %s1909, 8
          %s1911 = scalar_lea.vmem [#allocation2], %s1910
          %1912 = dma.done %s1908, 128
        $region52: #{cat_attention.1} parent=47 // pred_fallthru
          _
        // Predicated region
        $region53: #{cat_attention.1} parent=47 // pred_check
          %p1913 = pneg %p159
        $region54: #{cat_attention.1} parent=47 // pred_check_branch
          %1915 = sbr.rel (%p1913) target = $region56
        $region55: #{cat_attention.1} parent=47 // pred_region
          %p1916 = scmp.lt.s32.totalorder %s21, 1
          %s1917 = scalar_select %p1916, %s21, 1
          %s1918 = smul.addr %s1917, 8
          %s1919 = scalar_lea.vmem %s5, %s1918
        $region56: #{cat_attention.1} parent=47 // pred_fallthru
          _
      $region48: #{cat_attention.1} parent=5 // pred_fallthru
        _
    $region6: #{cat_attention.1} parent=1 // loop_footer
      %s19 = sadd.s32 1, %s15
    $region7: #{cat_attention.1} parent=1 // loop_footer_branch
      %14 = sbr.rel target = $region3
    $region8: #{cat_attention.1} parent=1 // loop_exit
      _
    %1920 = vsyncpa [#allocation3], 1
    %s1921 = scalar_lea.sflag [#allocation3], 1
    %1922 = vsyncpa %s1921, 1

</llo_original>
